<compile_context>
chip_gen: v5e
topology: v5e:2x2
jax: 0.10.0
libtpu: 0.0.40
codegen_flags: <defaults>
</compile_context>

<pallas_src>
import math
import jax
import jax.numpy as jnp
from jax.experimental import pallas as pl
from jax.experimental.pallas import tpu as pltpu

BN_EPS = 1e-5
LANE = 128


def _round_up(x, m):
    return ((x + m - 1) // m) * m


# ----------------------------------------------------------------------------
# Parameter construction (matches the PyTorch module's init)
# ----------------------------------------------------------------------------
def init_fc_layers(key, input_size, hidden_size, batch_norm=True):
    """xavier_normal_(gain=1.0) Linear weights, zero biases, default BN stats."""
    dims = [input_size] + list(hidden_size)
    n = len(hidden_size)
    keys = jax.random.split(key, n)
    layers = []
    for li in range(n):
        fan_in, fan_out = dims[li], dims[li + 1]
        std = math.sqrt(2.0 / (fan_in + fan_out))
        w = std * jax.random.normal(keys[li], (fan_out, fan_in), dtype=jnp.float32)
        b = jnp.zeros((fan_out,), dtype=jnp.float32)
        layer = {"w": w, "b": b}
        # BN is placed after every Linear except the last one (see reference module)
        if batch_norm and li < n - 1:
            layer["bn"] = {
                "gamma": jnp.ones((fan_out,), jnp.float32),
                "beta": jnp.zeros((fan_out,), jnp.float32),
                "mean": jnp.zeros((fan_out,), jnp.float32),
                "var": jnp.ones((fan_out,), jnp.float32),
            }
        layers.append(layer)
    return layers


def prepare_params(layers, *, bn_eps=BN_EPS, pad_to=LANE,
                   compute_dtype=jnp.bfloat16):
    """Fold eval-mode BN into the Linear, transpose to (in, out), zero-pad the
    output (and non-first input) feature dims to `pad_to` lanes, cast weights to
    the MXU compute dtype. Returns flat list [w1, b1, w2, b2, ...]."""
    prepared = []
    for li, layer in enumerate(layers):
        w = layer["w"].astype(jnp.float32)          # (out, in)  torch convention
        b = layer["b"].astype(jnp.float32)          # (out,)
        bn = layer.get("bn")
        if bn is not None:
            scale = bn["gamma"] * jax.lax.rsqrt(bn["var"] + bn_eps)
            w = w * scale[:, None]
            b = (b - bn["mean"]) * scale + bn["beta"]
        wt = w.T                                    # (in, out) -> lane-dense for MXU
        in_dim, out_dim = wt.shape
        in_pad = in_dim if li == 0 else _round_up(in_dim, pad_to)
        out_pad = _round_up(out_dim, pad_to)
        wt = jnp.pad(wt, ((0, in_pad - in_dim), (0, out_pad - out_dim)))
        bp = jnp.pad(b, (0, out_pad - out_dim)).reshape(1, out_pad)
        prepared.append(wt.astype(compute_dtype))   # bf16 MXU operand
        prepared.append(bp)                         # f32 epilogue operand
    return prepared


# ----------------------------------------------------------------------------
# Kernel
# ----------------------------------------------------------------------------
def make_mlp_kernel(n_layers, *, sigmoid, compute_dtype):
    def kernel(*refs):
        x_ref = refs[0]
        o_ref = refs[-1]
        p_refs = refs[1:-1]                         # w1, b1, w2, b2, ...
        h = x_ref[...]                              # bf16, (tile_b, in_dim)
        for li in range(n_layers):
            w = p_refs[2 * li][...]                 # (in_pad, out_pad) bf16
            b = p_refs[2 * li + 1][...]             # (1, out_pad) f32
            h = jnp.dot(h, w, preferred_element_type=jnp.float32) + b
            if li < n_layers - 1:
                # ReLU in f32, then narrow only the next matmul operand to bf16.
                # (Dropout is identity in inference.)
                h = jnp.maximum(h, 0.0).astype(compute_dtype)
        if sigmoid:
            h = jax.nn.sigmoid(h)                   # EUP, f32
        o_ref[...] = h.astype(o_ref.dtype)
    return kernel


# ----------------------------------------------------------------------------
# Wrapper
# ----------------------------------------------------------------------------
def fully_connected_forward(x, layers, *, tile_b=256, sigmoid=True,
                            compute_dtype=jnp.bfloat16):
    """x: (B, input_size) float32. layers: list of {'w','b'[, 'bn']} dicts."""
    B, in_dim = x.shape
    n_layers = len(layers)
    out_dim = layers[-1]["w"].shape[0]

    params = prepare_params(layers, compute_dtype=compute_dtype)
    out_pad = params[-1].shape[-1]                  # padded final feature dim

    # Batch tiling: tile_b rows per grid step (multiple of 8), pad B if needed.
    tile_b = max(8, _round_up(min(tile_b, B), 8))
    B_pad = _round_up(B, tile_b)
    xin = x.astype(compute_dtype)
    if B_pad != B:
        xin = jnp.pad(xin, ((0, B_pad - B), (0, 0)))
    grid = (B_pad // tile_b,)

    x_spec = pl.BlockSpec((tile_b, in_dim), lambda i: (i, 0))
    o_spec = pl.BlockSpec((tile_b, out_pad), lambda i: (i, 0))
    # Parameters are tiny and resident: replicate full arrays to every grid step.
    # NOTE: bind ndim explicitly to avoid the late-binding-lambda bug.
    param_specs = [pl.BlockSpec(p.shape, lambda i, nd=p.ndim: (0,) * nd)
                   for p in params]

    flops = 2 * B_pad * sum(int(w.shape[0]) * int(w.shape[1]) for w in params[0::2])
    bytes_accessed = (xin.size * xin.dtype.itemsize
                      + sum(int(p.size) * p.dtype.itemsize for p in params)
                      + B_pad * out_pad * 4)
    cost = pl.CostEstimate(flops=int(flops),
                           transcendentals=int(B_pad * out_pad if sigmoid else 0),
                           bytes_accessed=int(bytes_accessed))

    out_full = pl.pallas_call(
        make_mlp_kernel(n_layers, sigmoid=sigmoid, compute_dtype=compute_dtype),
        out_shape=jax.ShapeDtypeStruct((B_pad, out_pad), jnp.float32),
        grid=grid,
        in_specs=[x_spec] + param_specs,
        out_specs=o_spec,
        compiler_params=pltpu.CompilerParams(
            dimension_semantics=("parallel",)),
        cost_estimate=cost,
    )(xin, *params)

    return out_full[:B, :out_dim]


# ----------------------------------------------------------------------------
# Pure-JAX reference (eval-mode semantics of the PyTorch module)
# ----------------------------------------------------------------------------
def reference_forward(x, layers, *, sigmoid=True, bn_eps=BN_EPS):
    h = x.astype(jnp.float32)
    n = len(layers)
    for li, layer in enumerate(layers):
        h = h @ layer["w"].T + layer["b"]
        bn = layer.get("bn")
        if bn is not None:
            h = (h - bn["mean"]) * jax.lax.rsqrt(bn["var"] + bn_eps) * bn["gamma"] + bn["beta"]
        if li < n - 1:
            h = jnp.maximum(h, 0.0)                 # ReLU (Dropout = identity in eval)
    return jax.nn.sigmoid(h) if sigmoid else h


if __name__ == "__main__":
    # FullyConnectedLayer(input_size=32, hidden_size=[64, 32, 16],
    #                     bias=[True, True, True], batch_norm=True,
    #                     dropout_rate=0.5, activation='relu', sigmoid=True)
    # TODO(synk): training-mode Dropout / batch-stat BatchNorm are not implemented
    # (inference semantics only).
    B, input_size = 1024, 32
    hidden_size = [64, 32, 16]

    key = jax.random.PRNGKey(0)
    kx, kp = jax.random.split(key)
    x = jax.random.normal(kx, (B, input_size), dtype=jnp.float32)
    layers = init_fc_layers(kp, input_size, hidden_size, batch_norm=True)

    out = fully_connected_forward(x, layers, tile_b=256, sigmoid=True)
    out = jax.block_until_ready(out)

    assert out.shape == (B, hidden_size[-1])
    assert bool(jnp.all(jnp.isfinite(out)))

    ref = reference_forward(x, layers, sigmoid=True)
    max_err = float(jnp.max(jnp.abs(out - ref)))
    assert max_err < 5e-2, f"max abs error vs reference too large: {max_err}"

    print("KERNEL_OK")
</pallas_src>

<mosaic_0001>
module attributes {stable_mosaic.version = 11 : i64} {
  func.func @kernel(%arg0: i32, %arg1: memref<256x32xbf16, #tpu.memory_space<vmem>>, %arg2: memref<32x128xbf16, #tpu.memory_space<vmem>>, %arg3: memref<1x128xf32, #tpu.memory_space<vmem>>, %arg4: memref<128x128xbf16, #tpu.memory_space<vmem>>, %arg5: memref<1x128xf32, #tpu.memory_space<vmem>>, %arg6: memref<128x128xbf16, #tpu.memory_space<vmem>>, %arg7: memref<1x128xf32, #tpu.memory_space<vmem>>, %arg8: memref<256x128xf32, #tpu.memory_space<vmem>>) attributes {dimension_semantics = [#tpu.dimension_semantics<parallel>], iteration_bounds = array<i64: 4>, scalar_prefetch = 0 : i64, scratch_operands = 0 : i64, tpu.core_type = #tpu.core_type<tc>, window_params = [{transform_indices = @transform_0, window_bounds = array<i64: 256, 32>}, {pipeline_mode = #tpu.pipeline_mode<synchronous>, transform_indices = @transform_1, window_bounds = array<i64: 32, 128>}, {pipeline_mode = #tpu.pipeline_mode<synchronous>, transform_indices = @transform_2, window_bounds = array<i64: 1, 128>}, {pipeline_mode = #tpu.pipeline_mode<synchronous>, transform_indices = @transform_3, window_bounds = array<i64: 128, 128>}, {pipeline_mode = #tpu.pipeline_mode<synchronous>, transform_indices = @transform_4, window_bounds = array<i64: 1, 128>}, {pipeline_mode = #tpu.pipeline_mode<synchronous>, transform_indices = @transform_5, window_bounds = array<i64: 128, 128>}, {pipeline_mode = #tpu.pipeline_mode<synchronous>, transform_indices = @transform_6, window_bounds = array<i64: 1, 128>}, {transform_indices = @transform_7, window_bounds = array<i64: 256, 128>}]} {
    %c0 = arith.constant 0 : index
    %c0_0 = arith.constant 0 : index
    %0 = vector.load %arg1[%c0, %c0_0] : memref<256x32xbf16, #tpu.memory_space<vmem>>, vector<256x32xbf16>
    %c0_1 = arith.constant 0 : index
    %c0_2 = arith.constant 0 : index
    %1 = vector.load %arg2[%c0_1, %c0_2] : memref<32x128xbf16, #tpu.memory_space<vmem>>, vector<32x128xbf16>
    %c0_3 = arith.constant 0 : index
    %c0_4 = arith.constant 0 : index
    %2 = vector.load %arg3[%c0_3, %c0_4] : memref<1x128xf32, #tpu.memory_space<vmem>>, vector<1x128xf32>
    %cst = arith.constant dense<0.000000e+00> : vector<256x128xf32>
    %3 = tpu.matmul %0, %1, %cst {dimension_numbers = #tpu.dot_dimension_numbers<[1], [0], [0], [1], [0, 0, 1, 1], [], []>} : vector<256x32xbf16>, vector<32x128xbf16>, vector<256x128xf32> -> vector<256x128xf32>
    %4 = vector.broadcast %2 : vector<1x128xf32> to vector<256x128xf32>
    %5 = arith.addf %3, %4 : vector<256x128xf32>
    %cst_5 = arith.constant 0.000000e+00 : f32
    %6 = vector.broadcast %cst_5 : f32 to vector<256x128xf32>
    %7 = arith.maximumf %5, %6 : vector<256x128xf32>
    %8 = arith.truncf %7 : vector<256x128xf32> to vector<256x128xbf16>
    %c0_6 = arith.constant 0 : index
    %c0_7 = arith.constant 0 : index
    %9 = vector.load %arg4[%c0_6, %c0_7] : memref<128x128xbf16, #tpu.memory_space<vmem>>, vector<128x128xbf16>
    %c0_8 = arith.constant 0 : index
    %c0_9 = arith.constant 0 : index
    %10 = vector.load %arg5[%c0_8, %c0_9] : memref<1x128xf32, #tpu.memory_space<vmem>>, vector<1x128xf32>
    %cst_10 = arith.constant dense<0.000000e+00> : vector<256x128xf32>
    %11 = tpu.matmul %8, %9, %cst_10 {dimension_numbers = #tpu.dot_dimension_numbers<[1], [0], [0], [1], [0, 0, 1, 1], [], []>} : vector<256x128xbf16>, vector<128x128xbf16>, vector<256x128xf32> -> vector<256x128xf32>
    %12 = vector.broadcast %10 : vector<1x128xf32> to vector<256x128xf32>
    %13 = arith.addf %11, %12 : vector<256x128xf32>
    %cst_11 = arith.constant 0.000000e+00 : f32
    %14 = vector.broadcast %cst_11 : f32 to vector<256x128xf32>
    %15 = arith.maximumf %13, %14 : vector<256x128xf32>
    %16 = arith.truncf %15 : vector<256x128xf32> to vector<256x128xbf16>
    %c0_12 = arith.constant 0 : index
    %c0_13 = arith.constant 0 : index
    %17 = vector.load %arg6[%c0_12, %c0_13] : memref<128x128xbf16, #tpu.memory_space<vmem>>, vector<128x128xbf16>
    %c0_14 = arith.constant 0 : index
    %c0_15 = arith.constant 0 : index
    %18 = vector.load %arg7[%c0_14, %c0_15] : memref<1x128xf32, #tpu.memory_space<vmem>>, vector<1x128xf32>
    %cst_16 = arith.constant dense<0.000000e+00> : vector<256x128xf32>
    %19 = tpu.matmul %16, %17, %cst_16 {dimension_numbers = #tpu.dot_dimension_numbers<[1], [0], [0], [1], [0, 0, 1, 1], [], []>} : vector<256x128xbf16>, vector<128x128xbf16>, vector<256x128xf32> -> vector<256x128xf32>
    %20 = vector.broadcast %18 : vector<1x128xf32> to vector<256x128xf32>
    %21 = arith.addf %19, %20 : vector<256x128xf32>
    %22 = arith.negf %21 : vector<256x128xf32>
    %23 = math.exp %22 : vector<256x128xf32>
    %cst_17 = arith.constant 1.000000e+00 : f32
    %24 = vector.broadcast %cst_17 : f32 to vector<256x128xf32>
    %25 = arith.addf %24, %23 : vector<256x128xf32>
    %26 = arith.divf %24, %25 : vector<256x128xf32>
    %c0_18 = arith.constant 0 : index
    %c0_19 = arith.constant 0 : index
    %27 = vector.load %arg8[%c0_18, %c0_19] : memref<256x128xf32, #tpu.memory_space<vmem>>, vector<256x128xf32>
    tpu.vector_store %arg8[%c0_18, %c0_19], %26 {strides = array<i32>} : memref<256x128xf32, #tpu.memory_space<vmem>>, vector<256x128xf32>,
    return
  }
  func.func @transform_0(%arg0: i32) -> (i32, i32) {
    %c0_i32 = arith.constant 0 : i32
    %c0_i32_0 = arith.constant 0 : i32
    return %arg0, %c0_i32 : i32, i32
  }
  func.func @transform_1(%arg0: i32) -> (i32, i32) {
    %c0_i32 = arith.constant 0 : i32
    %c0_i32_0 = arith.constant 0 : i32
    %c0_i32_1 = arith.constant 0 : i32
    return %c0_i32, %c0_i32_0 : i32, i32
  }
  func.func @transform_2(%arg0: i32) -> (i32, i32) {
    %c0_i32 = arith.constant 0 : i32
    %c0_i32_0 = arith.constant 0 : i32
    %c0_i32_1 = arith.constant 0 : i32
    return %c0_i32, %c0_i32_0 : i32, i32
  }
  func.func @transform_3(%arg0: i32) -> (i32, i32) {
    %c0_i32 = arith.constant 0 : i32
    %c0_i32_0 = arith.constant 0 : i32
    %c0_i32_1 = arith.constant 0 : i32
    return %c0_i32, %c0_i32_0 : i32, i32
  }
  func.func @transform_4(%arg0: i32) -> (i32, i32) {
    %c0_i32 = arith.constant 0 : i32
    %c0_i32_0 = arith.constant 0 : i32
    %c0_i32_1 = arith.constant 0 : i32
    return %c0_i32, %c0_i32_0 : i32, i32
  }
  func.func @transform_5(%arg0: i32) -> (i32, i32) {
    %c0_i32 = arith.constant 0 : i32
    %c0_i32_0 = arith.constant 0 : i32
    %c0_i32_1 = arith.constant 0 : i32
    return %c0_i32, %c0_i32_0 : i32, i32
  }
  func.func @transform_6(%arg0: i32) -> (i32, i32) {
    %c0_i32 = arith.constant 0 : i32
    %c0_i32_0 = arith.constant 0 : i32
    %c0_i32_1 = arith.constant 0 : i32
    return %c0_i32, %c0_i32_0 : i32, i32
  }
  func.func @transform_7(%arg0: i32) -> (i32, i32) {
    %c0_i32 = arith.constant 0 : i32
    %c0_i32_0 = arith.constant 0 : i32
    return %arg0, %c0_i32 : i32, i32
  }
}

</mosaic_0001>

<llo_original>
// kernel: tpu_custom_call.1
$region0: #{tpu_custom_call.1}
  #allocation0 [shape = 'u32[]', space=smem, size = 0x4, offset = 0x4, fixed_abs, tag = 'smem constant byte address 0x4 - core index']
  #allocation1 [shape = 'u32[72,128]{1,0:T(1,128)}', space=vmem, size = 0x9000, scoped, tag = 'internal scratch']
  %s0 = inlined_call_operand.vmem [shape: bf16[1024,32], index: 0, kind: input, shape index: {}]
  %s1 = inlined_call_operand.vmem [shape: bf16[32,128], index: 1, kind: input, shape index: {}]
  %s2 = inlined_call_operand.vmem [shape: f32[1,128], index: 2, kind: input, shape index: {}]
  %s3 = inlined_call_operand.vmem [shape: bf16[128,128], index: 3, kind: input, shape index: {}]
  %s4 = inlined_call_operand.vmem [shape: f32[1,128], index: 4, kind: input, shape index: {}]
  %s5 = inlined_call_operand.vmem [shape: bf16[128,128], index: 5, kind: input, shape index: {}]
  %s6 = inlined_call_operand.vmem [shape: f32[1,128], index: 6, kind: input, shape index: {}]
  %s7 = inlined_call_operand.hbm [shape: f32[1024,128], index: 7, kind: output, shape index: {}]
  %s8 = sld [smem:[#allocation0]]
  $region61: #{tpu_custom_call.1} parent=0
    _
  %s10 = ssub.s32 1, %s8
  %s11 = scalar_select 0, %s10, %s8
  $region1: #{tpu_custom_call.1} parent=0
    #allocation2 [shape = 'u8[262144]{0}', space=vmem, size = 0x40000, scoped, tag = 'output window, operand 0']
    #allocation3 [shape = 's32[2]{0}', space=sflag, size = 0x8, scoped, tag = 'scoped memory for tpu_custom_call.1']
    %12 = vsyncpa [#allocation3], 0
    %s13 = scalar_lea.sflag [#allocation3], 1
    %14 = vsyncpa %s13, 0
    loop: start=0, step=1, limit=6
    $region2: #{tpu_custom_call.1} parent=1 // loop_pre_header
      _
    $region3: #{tpu_custom_call.1} parent=1 // loop_header
      %s16 = sphi 0, %s20
      %p17 = scmp.ge.s32.totalorder %s16, 6
      %s26 = sphi 0, %s28
      %s29 = sphi 0, %s26
      %s30 = sphi 0, %s29
      %s46 = sphi 0, %s30
      %s50 = sphi 0, %s50
      %s52 = sphi 0, %s50
      %s53 = sphi 0, %s52
      %s67 = sphi 0, %s53
      %s71 = sphi 0, %s71
      %s73 = sphi 0, %s71
      %s74 = sphi 0, %s73
      %s88 = sphi 0, %s74
      %s92 = sphi 0, %s92
      %s94 = sphi 0, %s92
      %s95 = sphi 0, %s94
      %s109 = sphi 0, %s95
      %s113 = sphi 0, %s113
      %s115 = sphi 0, %s113
      %s116 = sphi 0, %s115
      %s130 = sphi 0, %s116
      %s134 = sphi 0, %s134
      %s136 = sphi 0, %s134
      %s137 = sphi 0, %s136
      %s151 = sphi 0, %s137
      %s155 = sphi 0, %s155
      %s157 = sphi 0, %s155
      %s158 = sphi 0, %s157
      %s172 = sphi 0, %s158
      %s178 = sphi 0, %s180
      %s181 = sphi 0, %s178
      %s182 = sphi 0, %s181
      %s198 = sphi 0, %s182
    $region4: #{tpu_custom_call.1} parent=1 // loop_header_branch
      %19 = sbr.rel (%p17) target = $region8
    $region5: #{tpu_custom_call.1} parent=1 // loop_body
      %s21 = ssub.s32 %s16, 1
      %s22 = ssub.s32 %s16, 2
      %s23 = sadd.s32 %s16, 1
      %s24 = ssub.s32 %s16, %s23
      %p25 = scmp.eq.s32.totalorder %s24, 0
      %s27 = sadd.s32 %s26, 1
      %s28 = scalar_select %p25, %s26, %s27
      %p31 = pneg %p25
      %p32 = scmp.eq.s32.totalorder %s16, 3
      %p33 = por %p31, %p32
      %p34 = scmp.ne.s32.totalorder %s26, %s29
      %p35 = scmp.eq.s32.totalorder %s16, 0
      %p36 = por %p34, %p35
      %p37 = scmp.ne.s32.totalorder %s26, %s29
      %p38 = scmp.eq.s32.totalorder %s21, 3
      %p39 = por %p37, %p38
      %p40 = scmp.ne.s32.totalorder %s29, %s30
      %p41 = scmp.eq.s32.totalorder %s21, 0
      %p42 = por %p40, %p41
      %p43 = scmp.ne.s32.totalorder %s29, %s30
      %p44 = scmp.eq.s32.totalorder %s22, 3
      %p45 = por %p43, %p44
      %p47 = scmp.ne.s32.totalorder %s30, %s46
      %p48 = scmp.eq.s32.totalorder %s22, 0
      %p49 = por %p47, %p48
      %s51 = sadd.s32 %s50, 1
      %p54 = scmp.eq.s32.totalorder %s16, 3
      %p55 = scmp.ne.s32.totalorder %s50, %s52
      %p56 = scmp.eq.s32.totalorder %s16, 0
      %p57 = por %p55, %p56
      %p58 = scmp.ne.s32.totalorder %s50, %s52
      %p59 = scmp.eq.s32.totalorder %s21, 3
      %p60 = por %p58, %p59
      %p61 = scmp.ne.s32.totalorder %s52, %s53
      %p62 = scmp.eq.s32.totalorder %s21, 0
      %p63 = por %p61, %p62
      %p64 = scmp.ne.s32.totalorder %s52, %s53
      %p65 = scmp.eq.s32.totalorder %s22, 3
      %p66 = por %p64, %p65
      %p68 = scmp.ne.s32.totalorder %s53, %s67
      %p69 = scmp.eq.s32.totalorder %s22, 0
      %p70 = por %p68, %p69
      %s72 = sadd.s32 %s71, 1
      %p75 = scmp.eq.s32.totalorder %s16, 3
      %p76 = scmp.ne.s32.totalorder %s71, %s73
      %p77 = scmp.eq.s32.totalorder %s16, 0
      %p78 = por %p76, %p77
      %p79 = scmp.ne.s32.totalorder %s71, %s73
      %p80 = scmp.eq.s32.totalorder %s21, 3
      %p81 = por %p79, %p80
      %p82 = scmp.ne.s32.totalorder %s73, %s74
      %p83 = scmp.eq.s32.totalorder %s21, 0
      %p84 = por %p82, %p83
      %p85 = scmp.ne.s32.totalorder %s73, %s74
      %p86 = scmp.eq.s32.totalorder %s22, 3
      %p87 = por %p85, %p86
      %p89 = scmp.ne.s32.totalorder %s74, %s88
      %p90 = scmp.eq.s32.totalorder %s22, 0
      %p91 = por %p89, %p90
      %s93 = sadd.s32 %s92, 1
      %p96 = scmp.eq.s32.totalorder %s16, 3
      %p97 = scmp.ne.s32.totalorder %s92, %s94
      %p98 = scmp.eq.s32.totalorder %s16, 0
      %p99 = por %p97, %p98
      %p100 = scmp.ne.s32.totalorder %s92, %s94
      %p101 = scmp.eq.s32.totalorder %s21, 3
      %p102 = por %p100, %p101
      %p103 = scmp.ne.s32.totalorder %s94, %s95
      %p104 = scmp.eq.s32.totalorder %s21, 0
      %p105 = por %p103, %p104
      %p106 = scmp.ne.s32.totalorder %s94, %s95
      %p107 = scmp.eq.s32.totalorder %s22, 3
      %p108 = por %p106, %p107
      %p110 = scmp.ne.s32.totalorder %s95, %s109
      %p111 = scmp.eq.s32.totalorder %s22, 0
      %p112 = por %p110, %p111
      %s114 = sadd.s32 %s113, 1
      %p117 = scmp.eq.s32.totalorder %s16, 3
      %p118 = scmp.ne.s32.totalorder %s113, %s115
      %p119 = scmp.eq.s32.totalorder %s16, 0
      %p120 = por %p118, %p119
      %p121 = scmp.ne.s32.totalorder %s113, %s115
      %p122 = scmp.eq.s32.totalorder %s21, 3
      %p123 = por %p121, %p122
      %p124 = scmp.ne.s32.totalorder %s115, %s116
      %p125 = scmp.eq.s32.totalorder %s21, 0
      %p126 = por %p124, %p125
      %p127 = scmp.ne.s32.totalorder %s115, %s116
      %p128 = scmp.eq.s32.totalorder %s22, 3
      %p129 = por %p127, %p128
      %p131 = scmp.ne.s32.totalorder %s116, %s130
      %p132 = scmp.eq.s32.totalorder %s22, 0
      %p133 = por %p131, %p132
      %s135 = sadd.s32 %s134, 1
      %p138 = scmp.eq.s32.totalorder %s16, 3
      %p139 = scmp.ne.s32.totalorder %s134, %s136
      %p140 = scmp.eq.s32.totalorder %s16, 0
      %p141 = por %p139, %p140
      %p142 = scmp.ne.s32.totalorder %s134, %s136
      %p143 = scmp.eq.s32.totalorder %s21, 3
      %p144 = por %p142, %p143
      %p145 = scmp.ne.s32.totalorder %s136, %s137
      %p146 = scmp.eq.s32.totalorder %s21, 0
      %p147 = por %p145, %p146
      %p148 = scmp.ne.s32.totalorder %s136, %s137
      %p149 = scmp.eq.s32.totalorder %s22, 3
      %p150 = por %p148, %p149
      %p152 = scmp.ne.s32.totalorder %s137, %s151
      %p153 = scmp.eq.s32.totalorder %s22, 0
      %p154 = por %p152, %p153
      %s156 = sadd.s32 %s155, 1
      %p159 = scmp.eq.s32.totalorder %s16, 3
      %p160 = scmp.ne.s32.totalorder %s155, %s157
      %p161 = scmp.eq.s32.totalorder %s16, 0
      %p162 = por %p160, %p161
      %p163 = scmp.ne.s32.totalorder %s155, %s157
      %p164 = scmp.eq.s32.totalorder %s21, 3
      %p165 = por %p163, %p164
      %p166 = scmp.ne.s32.totalorder %s157, %s158
      %p167 = scmp.eq.s32.totalorder %s21, 0
      %p168 = por %p166, %p167
      %p169 = scmp.ne.s32.totalorder %s157, %s158
      %p170 = scmp.eq.s32.totalorder %s22, 3
      %p171 = por %p169, %p170
      %p173 = scmp.ne.s32.totalorder %s158, %s172
      %p174 = scmp.eq.s32.totalorder %s22, 0
      %p175 = por %p173, %p174
      %s176 = ssub.s32 %s16, %s23
      %p177 = scmp.eq.s32.totalorder %s176, 0
      %s179 = sadd.s32 %s178, 1
      %s180 = scalar_select %p177, %s178, %s179
      %p183 = pneg %p177
      %p184 = scmp.eq.s32.totalorder %s16, 3
      %p185 = por %p183, %p184
      %p186 = scmp.ne.s32.totalorder %s178, %s181
      %p187 = scmp.eq.s32.totalorder %s16, 0
      %p188 = por %p186, %p187
      %p189 = scmp.ne.s32.totalorder %s178, %s181
      %p190 = scmp.eq.s32.totalorder %s21, 3
      %p191 = por %p189, %p190
      %p192 = scmp.ne.s32.totalorder %s181, %s182
      %p193 = scmp.eq.s32.totalorder %s21, 0
      %p194 = por %p192, %p193
      %p195 = scmp.ne.s32.totalorder %s181, %s182
      %p196 = scmp.eq.s32.totalorder %s22, 3
      %p197 = por %p195, %p196
      %p199 = scmp.ne.s32.totalorder %s182, %s198
      %p200 = scmp.eq.s32.totalorder %s22, 0
      %p201 = por %p199, %p200
      %p202 = scmp.le.s32.totalorder 1, %s16
      %p203 = scmp.lt.s32.totalorder %s16, 5
      %p204 = pnand %p202, %p203
      %p205 = pneg %p204
      // Predicated region
      $region9: #{tpu_custom_call.1} parent=5 // pred_check
        _
      $region10: #{tpu_custom_call.1} parent=5 // pred_check_branch
        %207 = sbr.rel (%p204) target = $region12
      $region11: #{tpu_custom_call.1} parent=5 // pred_region
        %s208 = ssub.s32 %s16, 1
        // Predicated region
        $region13: #{tpu_custom_call.1} parent=11 // pred_check
          %p209 = pneg %p63
        $region14: #{tpu_custom_call.1} parent=11 // pred_check_branch
          %211 = sbr.rel (%p209) target = $region16
        $region15: #{tpu_custom_call.1} parent=11 // pred_region
          _
        $region16: #{tpu_custom_call.1} parent=11 // pred_fallthru
          _
        // Predicated region
        $region17: #{tpu_custom_call.1} parent=11 // pred_check
          %p212 = pneg %p84
        $region18: #{tpu_custom_call.1} parent=11 // pred_check_branch
          %214 = sbr.rel (%p212) target = $region20
        $region19: #{tpu_custom_call.1} parent=11 // pred_region
          _
        $region20: #{tpu_custom_call.1} parent=11 // pred_fallthru
          _
        // Predicated region
        $region21: #{tpu_custom_call.1} parent=11 // pred_check
          %p215 = pneg %p105
        $region22: #{tpu_custom_call.1} parent=11 // pred_check_branch
          %217 = sbr.rel (%p215) target = $region24
        $region23: #{tpu_custom_call.1} parent=11 // pred_region
          _
        $region24: #{tpu_custom_call.1} parent=11 // pred_fallthru
          _
        // Predicated region
        $region25: #{tpu_custom_call.1} parent=11 // pred_check
          %p218 = pneg %p126
        $region26: #{tpu_custom_call.1} parent=11 // pred_check_branch
          %220 = sbr.rel (%p218) target = $region28
        $region27: #{tpu_custom_call.1} parent=11 // pred_region
          _
        $region28: #{tpu_custom_call.1} parent=11 // pred_fallthru
          _
        // Predicated region
        $region29: #{tpu_custom_call.1} parent=11 // pred_check
          %p221 = pneg %p147
        $region30: #{tpu_custom_call.1} parent=11 // pred_check_branch
          %223 = sbr.rel (%p221) target = $region32
        $region31: #{tpu_custom_call.1} parent=11 // pred_region
          _
        $region32: #{tpu_custom_call.1} parent=11 // pred_fallthru
          _
        // Predicated region
        $region33: #{tpu_custom_call.1} parent=11 // pred_check
          %p224 = pneg %p168
        $region34: #{tpu_custom_call.1} parent=11 // pred_check_branch
          %226 = sbr.rel (%p224) target = $region36
        $region35: #{tpu_custom_call.1} parent=11 // pred_region
          _
        $region36: #{tpu_custom_call.1} parent=11 // pred_fallthru
          _
      $region12: #{tpu_custom_call.1} parent=5 // pred_fallthru
        _
      %p227 = scmp.lt.s32.totalorder %s16, 4
      // Predicated region
      $region37: #{tpu_custom_call.1} parent=5 // pred_check
        %p228 = pneg %p227
      $region38: #{tpu_custom_call.1} parent=5 // pred_check_branch
        %230 = sbr.rel (%p228) target = $region40
      $region39: #{tpu_custom_call.1} parent=5 // pred_region
        // Predicated region
        $region41: #{tpu_custom_call.1} parent=39 // pred_check
          %p231 = pneg %p36
        $region42: #{tpu_custom_call.1} parent=39 // pred_check_branch
          %233 = sbr.rel (%p231) target = $region44
        $region43: #{tpu_custom_call.1} parent=39 // pred_region
          %s234 = smul.u32 32, %s16
          %p235 = scmp.lt.s32.totalorder %s234, 127
          %s236 = scalar_select %p235, %s234, 127
          %s237 = smul.addr %s236, 4
          %s238 = scalar_lea.vmem %s0, %s237
          %s239 = smul.u32 32, %s16
        $region44: #{tpu_custom_call.1} parent=39 // pred_fallthru
          _
      $region40: #{tpu_custom_call.1} parent=5 // pred_fallthru
        _
      %p240 = scmp.le.s32.totalorder 1, %s16
      %p241 = scmp.lt.s32.totalorder %s16, 5
      %p242 = pnand %p240, %p241
      %p243 = pneg %p242
      // Predicated region
      $region45: #{tpu_custom_call.1} parent=5 // pred_check
        _
      $region46: #{tpu_custom_call.1} parent=5 // pred_check_branch
        %245 = sbr.rel (%p242) target = $region48
      $region47: #{tpu_custom_call.1} parent=5 // pred_region
        %s246 = ssub.s32 %s16, 1
        %s247 = smul.u32 32, %s21
        %p248 = scmp.lt.s32.totalorder %s247, 127
        %s249 = scalar_select %p248, %s247, 127
        %s250 = smul.addr %s249, 4
        %s251 = scalar_lea.vmem %s0, %s250
        %p252 = pneg %p42
        %p253 = pneg %p39
        %p254 = pneg %p63
        %p255 = pneg %p60
        %p256 = pneg %p84
        %p257 = pneg %p81
        %p258 = pneg %p105
        %p259 = pneg %p102
        %p260 = pneg %p126
        %p261 = pneg %p123
        %p262 = pneg %p147
        %p263 = pneg %p144
        %p264 = pneg %p168
        %p265 = pneg %p165
        %p266 = pneg %p194
        %p267 = pneg %p191
        %s268 = sand.u32 %s181, 1
        %s269 = scalar_lea.sflag [#allocation3], %s268
        %s270 = sand.u32 %s181, 1
        %s271 = smul.addr %s270, 256
        %s272 = scalar_lea.vmem [#allocation2], %s271
        %s273 = smul.u32 32, %s21
        %p274 = scmp.lt.s32.totalorder %s273, 127
        %s275 = scalar_select %p274, %s273, 127
        %s276 = smul.addr %s275, 4
        %s277 = scalar_lea.vmem %s0, %s276
        %s278 = smul.u32 32, %s21
        %s279 = smul.u32 32, %s21
        %v281 = vld [vmem:[%s277] sm:$0xf]
        %v282 = vld [vmem:[%s277 + $0x4] sm:$0xf]
        %v283 = vld [vmem:[%s277 + $0x8] sm:$0xf]
        %v284 = vld [vmem:[%s277 + $0xc] sm:$0xf]
        %v285 = vld [vmem:[%s277 + $0x10] sm:$0xf]
        %v286 = vld [vmem:[%s277 + $0x14] sm:$0xf]
        %v287 = vld [vmem:[%s277 + $0x18] sm:$0xf]
        %v288 = vld [vmem:[%s277 + $0x1c] sm:$0xf]
        %v289 = vld [vmem:[%s277 + $0x20] sm:$0xf]
        %v290 = vld [vmem:[%s277 + $0x24] sm:$0xf]
        %v291 = vld [vmem:[%s277 + $0x28] sm:$0xf]
        %v292 = vld [vmem:[%s277 + $0x2c] sm:$0xf]
        %v293 = vld [vmem:[%s277 + $0x30] sm:$0xf]
        %v294 = vld [vmem:[%s277 + $0x34] sm:$0xf]
        %v295 = vld [vmem:[%s277 + $0x38] sm:$0xf]
        %v296 = vld [vmem:[%s277 + $0x3c] sm:$0xf]
        %v297 = vld [vmem:[%s277 + $0x40] sm:$0xf]
        %v298 = vld [vmem:[%s277 + $0x44] sm:$0xf]
        %v299 = vld [vmem:[%s277 + $0x48] sm:$0xf]
        %v300 = vld [vmem:[%s277 + $0x4c] sm:$0xf]
        %v301 = vld [vmem:[%s277 + $0x50] sm:$0xf]
        %v302 = vld [vmem:[%s277 + $0x54] sm:$0xf]
        %v303 = vld [vmem:[%s277 + $0x58] sm:$0xf]
        %v304 = vld [vmem:[%s277 + $0x5c] sm:$0xf]
        %v305 = vld [vmem:[%s277 + $0x60] sm:$0xf]
        %v306 = vld [vmem:[%s277 + $0x64] sm:$0xf]
        %v307 = vld [vmem:[%s277 + $0x68] sm:$0xf]
        %v308 = vld [vmem:[%s277 + $0x6c] sm:$0xf]
        %v309 = vld [vmem:[%s277 + $0x70] sm:$0xf]
        %v310 = vld [vmem:[%s277 + $0x74] sm:$0xf]
        %v311 = vld [vmem:[%s277 + $0x78] sm:$0xf]
        %v312 = vld [vmem:[%s277 + $0x7c] sm:$0xf]
        %v313 = vld [vmem:[%s1] sm:$0xf]
        %v314 = vld [vmem:[%s1 + $0x4] sm:$0xf]
        %v315 = vld [vmem:[%s1 + $0x8] sm:$0xf]
        %v316 = vld [vmem:[%s1 + $0xc] sm:$0xf]
        %v317 = vld [vmem:[%s2] sm:$0x1]
        %v319 = vperm.slane %v317, 0
        %v353 = vunpack.c.l.b16 %v281
        %v354 = vunpack.c.l.b16 %v282
        %v355 = vunpack.c.l.b16 %v283
        %v356 = vunpack.c.l.b16 %v284
        %v357 = vunpack.c.l.b16 %v285
        %v358 = vunpack.c.l.b16 %v286
        %v359 = vunpack.c.l.b16 %v287
        %v360 = vunpack.c.l.b16 %v288
        %v361 = vunpack.c.l.b16 %v289
        %v362 = vunpack.c.l.b16 %v290
        %v363 = vunpack.c.l.b16 %v291
        %v364 = vunpack.c.l.b16 %v292
        %v365 = vunpack.c.l.b16 %v293
        %v366 = vunpack.c.l.b16 %v294
        %v367 = vunpack.c.l.b16 %v295
        %v368 = vunpack.c.l.b16 %v296
        %v369 = vunpack.c.l.b16 %v297
        %v370 = vunpack.c.l.b16 %v298
        %v371 = vunpack.c.l.b16 %v299
        %v372 = vunpack.c.l.b16 %v300
        %v373 = vunpack.c.l.b16 %v301
        %v374 = vunpack.c.l.b16 %v302
        %v375 = vunpack.c.l.b16 %v303
        %v376 = vunpack.c.l.b16 %v304
        %v377 = vunpack.c.l.b16 %v305
        %v378 = vunpack.c.l.b16 %v306
        %v379 = vunpack.c.l.b16 %v307
        %v380 = vunpack.c.l.b16 %v308
        %v381 = vunpack.c.l.b16 %v309
        %v382 = vunpack.c.l.b16 %v310
        %v383 = vunpack.c.l.b16 %v311
        %v384 = vunpack.c.l.b16 %v312
        %v385 = vpack.c.b16 %v354, %v353
        %v386 = vpack.c.b16 %v356, %v355
        %v387 = vpack.c.b16 %v358, %v357
        %v388 = vpack.c.b16 %v360, %v359
        %v389 = vpack.c.b16 %v362, %v361
        %v390 = vpack.c.b16 %v364, %v363
        %v391 = vpack.c.b16 %v366, %v365
        %v392 = vpack.c.b16 %v368, %v367
        %v393 = vpack.c.b16 %v370, %v369
        %v394 = vpack.c.b16 %v372, %v371
        %v395 = vpack.c.b16 %v374, %v373
        %v396 = vpack.c.b16 %v376, %v375
        %v397 = vpack.c.b16 %v378, %v377
        %v398 = vpack.c.b16 %v380, %v379
        %v399 = vpack.c.b16 %v382, %v381
        %v400 = vpack.c.b16 %v384, %v383
        %v405 = vunpack.c.l.b16 %v313
        %v406 = vunpack.c.l.b16 %v314
        %v407 = vunpack.c.l.b16 %v315
        %v408 = vunpack.c.l.b16 %v316
        %v409 = vpack.c.b16 %v406, %v405
        %v410 = vpack.c.b16 %v408, %v407
        %vm413 = vcmask 261120
        %v415 = vsel %vm413, %v385, 0
        %v418 = vsel %vm413, %v386, 0
        %v421 = vsel %vm413, %v387, 0
        %v424 = vsel %vm413, %v388, 0
        %v427 = vsel %vm413, %v389, 0
        %v430 = vsel %vm413, %v390, 0
        %v433 = vsel %vm413, %v391, 0
        %v436 = vsel %vm413, %v392, 0
        %v439 = vsel %vm413, %v393, 0
        %v442 = vsel %vm413, %v394, 0
        %v445 = vsel %vm413, %v395, 0
        %v448 = vsel %vm413, %v396, 0
        %v451 = vsel %vm413, %v397, 0
        %v454 = vsel %vm413, %v398, 0
        %v457 = vsel %vm413, %v399, 0
        %v460 = vsel %vm413, %v400, 0
        %462 = vmatpush.bf16.msra.mxu0 0
        %463 = vmatpush.bf16.msra.mxu0 0
        %464 = vmatpush.bf16.msra.mxu0 0
        %465 = vmatpush.bf16.msra.mxu0 0
        %466 = vmatpush.bf16.msra.mxu0 0
        %467 = vmatpush.bf16.msra.mxu0 0
        %468 = vmatpush.bf16.msra.mxu0 %v410
        %469 = vmatpush.bf16.msra.mxu0 %v409
        %470 = vmatmul.bf16.gmra.mxu0 %v415
        %v471 = vpop.f32.mrf.mxu0
        %v472 = vadd.f32 %v319, %v471
        %v473 = vpop.f32.mrf.mxu0
        %v474 = vadd.f32 %v319, %v473
        %475 = vmatmul.bf16.gmra.mxu0 %v418
        %v476 = vpop.f32.mrf.mxu0
        %v477 = vadd.f32 %v319, %v476
        %v478 = vpop.f32.mrf.mxu0
        %v479 = vadd.f32 %v319, %v478
        %480 = vmatmul.bf16.gmra.mxu0 %v421
        %v481 = vpop.f32.mrf.mxu0
        %v482 = vadd.f32 %v319, %v481
        %v483 = vpop.f32.mrf.mxu0
        %v484 = vadd.f32 %v319, %v483
        %485 = vmatmul.bf16.gmra.mxu0 %v424
        %v486 = vpop.f32.mrf.mxu0
        %v487 = vadd.f32 %v319, %v486
        %v488 = vpop.f32.mrf.mxu0
        %v489 = vadd.f32 %v319, %v488
        %490 = vmatmul.bf16.gmra.mxu0 %v427
        %v491 = vpop.f32.mrf.mxu0
        %v492 = vadd.f32 %v319, %v491
        %v493 = vpop.f32.mrf.mxu0
        %v494 = vadd.f32 %v319, %v493
        %495 = vmatmul.bf16.gmra.mxu0 %v430
        %v496 = vpop.f32.mrf.mxu0
        %v497 = vadd.f32 %v319, %v496
        %v498 = vpop.f32.mrf.mxu0
        %v499 = vadd.f32 %v319, %v498
        %500 = vmatmul.bf16.gmra.mxu0 %v433
        %v501 = vpop.f32.mrf.mxu0
        %v502 = vadd.f32 %v319, %v501
        %v503 = vpop.f32.mrf.mxu0
        %v504 = vadd.f32 %v319, %v503
        %505 = vmatmul.bf16.gmra.mxu0 %v436
        %v506 = vpop.f32.mrf.mxu0
        %v507 = vadd.f32 %v319, %v506
        %v508 = vpop.f32.mrf.mxu0
        %v509 = vadd.f32 %v319, %v508
        %510 = vmatmul.bf16.gmra.mxu0 %v439
        %v511 = vpop.f32.mrf.mxu0
        %v512 = vadd.f32 %v319, %v511
        %v513 = vpop.f32.mrf.mxu0
        %v514 = vadd.f32 %v319, %v513
        %515 = vmatmul.bf16.gmra.mxu0 %v442
        %v516 = vpop.f32.mrf.mxu0
        %v517 = vadd.f32 %v319, %v516
        %v518 = vpop.f32.mrf.mxu0
        %v519 = vadd.f32 %v319, %v518
        %520 = vmatmul.bf16.gmra.mxu0 %v445
        %v521 = vpop.f32.mrf.mxu0
        %v522 = vadd.f32 %v319, %v521
        %v523 = vpop.f32.mrf.mxu0
        %v524 = vadd.f32 %v319, %v523
        %525 = vmatmul.bf16.gmra.mxu0 %v448
        %v526 = vpop.f32.mrf.mxu0
        %v527 = vadd.f32 %v319, %v526
        %v528 = vpop.f32.mrf.mxu0
        %v529 = vadd.f32 %v319, %v528
        %530 = vmatmul.bf16.gmra.mxu0 %v451
        %v531 = vpop.f32.mrf.mxu0
        %v532 = vadd.f32 %v319, %v531
        %v533 = vpop.f32.mrf.mxu0
        %v534 = vadd.f32 %v319, %v533
        %535 = vmatmul.bf16.gmra.mxu0 %v454
        %v536 = vpop.f32.mrf.mxu0
        %v537 = vadd.f32 %v319, %v536
        %v538 = vpop.f32.mrf.mxu0
        %v539 = vadd.f32 %v319, %v538
        %540 = vmatmul.bf16.gmra.mxu0 %v457
        %v541 = vpop.f32.mrf.mxu0
        %v542 = vadd.f32 %v319, %v541
        %v543 = vpop.f32.mrf.mxu0
        %v544 = vadd.f32 %v319, %v543
        %545 = vmatmul.bf16.gmra.mxu0 %v460
        %v546 = vpop.f32.mrf.mxu0
        %v547 = vadd.f32 %v319, %v546
        %v548 = vpop.f32.mrf.mxu0
        %v549 = vadd.f32 %v319, %v548
        %550 = vdwg.mxu0
        %v551 = vmax.f32 %v472, 0.0
        %v552 = vmax.f32 %v474, 0.0
        %v553 = vmax.f32 %v477, 0.0
        %v554 = vmax.f32 %v479, 0.0
        %v555 = vmax.f32 %v482, 0.0
        %v556 = vmax.f32 %v484, 0.0
        %v557 = vmax.f32 %v487, 0.0
        %v558 = vmax.f32 %v489, 0.0
        %v559 = vmax.f32 %v492, 0.0
        %v560 = vmax.f32 %v494, 0.0
        %v561 = vmax.f32 %v497, 0.0
        %v562 = vmax.f32 %v499, 0.0
        %v563 = vmax.f32 %v502, 0.0
        %v564 = vmax.f32 %v504, 0.0
        %v565 = vmax.f32 %v507, 0.0
        %v566 = vmax.f32 %v509, 0.0
        %v567 = vmax.f32 %v512, 0.0
        %v568 = vmax.f32 %v514, 0.0
        %v569 = vmax.f32 %v517, 0.0
        %v570 = vmax.f32 %v519, 0.0
        %v571 = vmax.f32 %v522, 0.0
        %v572 = vmax.f32 %v524, 0.0
        %v573 = vmax.f32 %v527, 0.0
        %v574 = vmax.f32 %v529, 0.0
        %v575 = vmax.f32 %v532, 0.0
        %v576 = vmax.f32 %v534, 0.0
        %v577 = vmax.f32 %v537, 0.0
        %v578 = vmax.f32 %v539, 0.0
        %v579 = vmax.f32 %v542, 0.0
        %v580 = vmax.f32 %v544, 0.0
        %v581 = vmax.f32 %v547, 0.0
        %v582 = vmax.f32 %v549, 0.0
        %v583 = vpack.c.bf16 %v552, %v551
        %v584 = vpack.c.bf16 %v554, %v553
        %v585 = vpack.c.bf16 %v556, %v555
        %v586 = vpack.c.bf16 %v558, %v557
        %v587 = vpack.c.bf16 %v560, %v559
        %v588 = vpack.c.bf16 %v562, %v561
        %v589 = vpack.c.bf16 %v564, %v563
        %v590 = vpack.c.bf16 %v566, %v565
        %v591 = vpack.c.bf16 %v568, %v567
        %v592 = vpack.c.bf16 %v570, %v569
        %v593 = vpack.c.bf16 %v572, %v571
        %v594 = vpack.c.bf16 %v574, %v573
        %v595 = vpack.c.bf16 %v576, %v575
        %v596 = vpack.c.bf16 %v578, %v577
        %v597 = vpack.c.bf16 %v580, %v579
        %v598 = vpack.c.bf16 %v582, %v581
        %v599 = vld [vmem:[%s3] sm:$0xf]
        %v600 = vld [vmem:[%s3 + $0x4] sm:$0xf]
        %v601 = vld [vmem:[%s3 + $0x8] sm:$0xf]
        %v602 = vld [vmem:[%s3 + $0xc] sm:$0xf]
        %v603 = vld [vmem:[%s3 + $0x10] sm:$0xf]
        %v604 = vld [vmem:[%s3 + $0x14] sm:$0xf]
        %v605 = vld [vmem:[%s3 + $0x18] sm:$0xf]
        %v606 = vld [vmem:[%s3 + $0x1c] sm:$0xf]
        %v607 = vld [vmem:[%s3 + $0x20] sm:$0xf]
        %v608 = vld [vmem:[%s3 + $0x24] sm:$0xf]
        %v609 = vld [vmem:[%s3 + $0x28] sm:$0xf]
        %v610 = vld [vmem:[%s3 + $0x2c] sm:$0xf]
        %v611 = vld [vmem:[%s3 + $0x30] sm:$0xf]
        %v612 = vld [vmem:[%s3 + $0x34] sm:$0xf]
        %v613 = vld [vmem:[%s3 + $0x38] sm:$0xf]
        %v614 = vld [vmem:[%s3 + $0x3c] sm:$0xf]
        %v615 = vld [vmem:[%s4] sm:$0x1]
        %v617 = vperm.slane %v615, 0
        %v635 = vunpack.c.l.b16 %v599
        %v636 = vunpack.c.l.b16 %v600
        %v637 = vunpack.c.l.b16 %v601
        %v638 = vunpack.c.l.b16 %v602
        %v639 = vunpack.c.l.b16 %v603
        %v640 = vunpack.c.l.b16 %v604
        %v641 = vunpack.c.l.b16 %v605
        %v642 = vunpack.c.l.b16 %v606
        %v643 = vunpack.c.l.b16 %v607
        %v644 = vunpack.c.l.b16 %v608
        %v645 = vunpack.c.l.b16 %v609
        %v646 = vunpack.c.l.b16 %v610
        %v647 = vunpack.c.l.b16 %v611
        %v648 = vunpack.c.l.b16 %v612
        %v649 = vunpack.c.l.b16 %v613
        %v650 = vunpack.c.l.b16 %v614
        %v651 = vpack.c.b16 %v636, %v635
        %v652 = vpack.c.b16 %v638, %v637
        %v653 = vpack.c.b16 %v640, %v639
        %v654 = vpack.c.b16 %v642, %v641
        %v655 = vpack.c.b16 %v644, %v643
        %v656 = vpack.c.b16 %v646, %v645
        %v657 = vpack.c.b16 %v648, %v647
        %v658 = vpack.c.b16 %v650, %v649
        %667 = vmatpush.bf16.msra.mxu0 %v658
        %668 = vmatpush.bf16.msra.mxu0 %v657
        %669 = vmatpush.bf16.msra.mxu0 %v656
        %670 = vmatpush.bf16.msra.mxu0 %v655
        %671 = vmatpush.bf16.msra.mxu0 %v654
        %672 = vmatpush.bf16.msra.mxu0 %v653
        %673 = vmatpush.bf16.msra.mxu0 %v652
        %674 = vmatpush.bf16.msra.mxu0 %v651
        %675 = vmatmul.bf16.gmra.mxu0 %v583
        %v676 = vpop.f32.mrf.mxu0
        %v677 = vadd.f32 %v617, %v676
        %v678 = vpop.f32.mrf.mxu0
        %v679 = vadd.f32 %v617, %v678
        %680 = vmatmul.bf16.gmra.mxu0 %v584
        %v681 = vpop.f32.mrf.mxu0
        %v682 = vadd.f32 %v617, %v681
        %v683 = vpop.f32.mrf.mxu0
        %v684 = vadd.f32 %v617, %v683
        %685 = vmatmul.bf16.gmra.mxu0 %v585
        %v686 = vpop.f32.mrf.mxu0
        %v687 = vadd.f32 %v617, %v686
        %v688 = vpop.f32.mrf.mxu0
        %v689 = vadd.f32 %v617, %v688
        %690 = vmatmul.bf16.gmra.mxu0 %v586
        %v691 = vpop.f32.mrf.mxu0
        %v692 = vadd.f32 %v617, %v691
        %v693 = vpop.f32.mrf.mxu0
        %v694 = vadd.f32 %v617, %v693
        %695 = vmatmul.bf16.gmra.mxu0 %v587
        %v696 = vpop.f32.mrf.mxu0
        %v697 = vadd.f32 %v617, %v696
        %v698 = vpop.f32.mrf.mxu0
        %v699 = vadd.f32 %v617, %v698
        %700 = vmatmul.bf16.gmra.mxu0 %v588
        %v701 = vpop.f32.mrf.mxu0
        %v702 = vadd.f32 %v617, %v701
        %v703 = vpop.f32.mrf.mxu0
        %v704 = vadd.f32 %v617, %v703
        %705 = vmatmul.bf16.gmra.mxu0 %v589
        %v706 = vpop.f32.mrf.mxu0
        %v707 = vadd.f32 %v617, %v706
        %v708 = vpop.f32.mrf.mxu0
        %v709 = vadd.f32 %v617, %v708
        %710 = vmatmul.bf16.gmra.mxu0 %v590
        %v711 = vpop.f32.mrf.mxu0
        %v712 = vadd.f32 %v617, %v711
        %v713 = vpop.f32.mrf.mxu0
        %v714 = vadd.f32 %v617, %v713
        %715 = vmatmul.bf16.gmra.mxu0 %v591
        %v716 = vpop.f32.mrf.mxu0
        %v717 = vadd.f32 %v617, %v716
        %v718 = vpop.f32.mrf.mxu0
        %v719 = vadd.f32 %v617, %v718
        %720 = vmatmul.bf16.gmra.mxu0 %v592
        %v721 = vpop.f32.mrf.mxu0
        %v722 = vadd.f32 %v617, %v721
        %v723 = vpop.f32.mrf.mxu0
        %v724 = vadd.f32 %v617, %v723
        %725 = vmatmul.bf16.gmra.mxu0 %v593
        %v726 = vpop.f32.mrf.mxu0
        %v727 = vadd.f32 %v617, %v726
        %v728 = vpop.f32.mrf.mxu0
        %v729 = vadd.f32 %v617, %v728
        %730 = vmatmul.bf16.gmra.mxu0 %v594
        %v731 = vpop.f32.mrf.mxu0
        %v732 = vadd.f32 %v617, %v731
        %v733 = vpop.f32.mrf.mxu0
        %v734 = vadd.f32 %v617, %v733
        %735 = vmatmul.bf16.gmra.mxu0 %v595
        %v736 = vpop.f32.mrf.mxu0
        %v737 = vadd.f32 %v617, %v736
        %v738 = vpop.f32.mrf.mxu0
        %v739 = vadd.f32 %v617, %v738
        %740 = vmatmul.bf16.gmra.mxu0 %v596
        %v741 = vpop.f32.mrf.mxu0
        %v742 = vadd.f32 %v617, %v741
        %v743 = vpop.f32.mrf.mxu0
        %v744 = vadd.f32 %v617, %v743
        %745 = vmatmul.bf16.gmra.mxu0 %v597
        %v746 = vpop.f32.mrf.mxu0
        %v747 = vadd.f32 %v617, %v746
        %v748 = vpop.f32.mrf.mxu0
        %v749 = vadd.f32 %v617, %v748
        %750 = vmatmul.bf16.gmra.mxu0 %v598
        %v751 = vpop.f32.mrf.mxu0
        %v752 = vadd.f32 %v617, %v751
        %v753 = vpop.f32.mrf.mxu0
        %v754 = vadd.f32 %v617, %v753
        %755 = vdwg.mxu0
        %v756 = vmax.f32 %v677, 0.0
        %v757 = vmax.f32 %v679, 0.0
        %v758 = vmax.f32 %v682, 0.0
        %v759 = vmax.f32 %v684, 0.0
        %v760 = vmax.f32 %v687, 0.0
        %v761 = vmax.f32 %v689, 0.0
        %v762 = vmax.f32 %v692, 0.0
        %v763 = vmax.f32 %v694, 0.0
        %v764 = vmax.f32 %v697, 0.0
        %v765 = vmax.f32 %v699, 0.0
        %v766 = vmax.f32 %v702, 0.0
        %v767 = vmax.f32 %v704, 0.0
        %v768 = vmax.f32 %v707, 0.0
        %v769 = vmax.f32 %v709, 0.0
        %v770 = vmax.f32 %v712, 0.0
        %v771 = vmax.f32 %v714, 0.0
        %v772 = vmax.f32 %v717, 0.0
        %v773 = vmax.f32 %v719, 0.0
        %v774 = vmax.f32 %v722, 0.0
        %v775 = vmax.f32 %v724, 0.0
        %v776 = vmax.f32 %v727, 0.0
        %v777 = vmax.f32 %v729, 0.0
        %v778 = vmax.f32 %v732, 0.0
        %v779 = vmax.f32 %v734, 0.0
        %v780 = vmax.f32 %v737, 0.0
        %v781 = vmax.f32 %v739, 0.0
        %v782 = vmax.f32 %v742, 0.0
        %v783 = vmax.f32 %v744, 0.0
        %v784 = vmax.f32 %v747, 0.0
        %v785 = vmax.f32 %v749, 0.0
        %v786 = vmax.f32 %v752, 0.0
        %v787 = vmax.f32 %v754, 0.0
        %v788 = vpack.c.bf16 %v757, %v756
        %v789 = vpack.c.bf16 %v759, %v758
        %v790 = vpack.c.bf16 %v761, %v760
        %v791 = vpack.c.bf16 %v763, %v762
        %v792 = vpack.c.bf16 %v765, %v764
        %v793 = vpack.c.bf16 %v767, %v766
        %v794 = vpack.c.bf16 %v769, %v768
        %v795 = vpack.c.bf16 %v771, %v770
        %v796 = vpack.c.bf16 %v773, %v772
        %v797 = vpack.c.bf16 %v775, %v774
        %v798 = vpack.c.bf16 %v777, %v776
        %v799 = vpack.c.bf16 %v779, %v778
        %v800 = vpack.c.bf16 %v781, %v780
        %v801 = vpack.c.bf16 %v783, %v782
        %v802 = vpack.c.bf16 %v785, %v784
        %v803 = vpack.c.bf16 %v787, %v786
        %v804 = vld [vmem:[%s5] sm:$0xf]
        %v805 = vld [vmem:[%s5 + $0x4] sm:$0xf]
        %v806 = vld [vmem:[%s5 + $0x8] sm:$0xf]
        %v807 = vld [vmem:[%s5 + $0xc] sm:$0xf]
        %v808 = vld [vmem:[%s5 + $0x10] sm:$0xf]
        %v809 = vld [vmem:[%s5 + $0x14] sm:$0xf]
        %v810 = vld [vmem:[%s5 + $0x18] sm:$0xf]
        %v811 = vld [vmem:[%s5 + $0x1c] sm:$0xf]
        %v812 = vld [vmem:[%s5 + $0x20] sm:$0xf]
        %v813 = vld [vmem:[%s5 + $0x24] sm:$0xf]
        %v814 = vld [vmem:[%s5 + $0x28] sm:$0xf]
        %v815 = vld [vmem:[%s5 + $0x2c] sm:$0xf]
        %v816 = vld [vmem:[%s5 + $0x30] sm:$0xf]
        %v817 = vld [vmem:[%s5 + $0x34] sm:$0xf]
        %v818 = vld [vmem:[%s5 + $0x38] sm:$0xf]
        %v819 = vld [vmem:[%s5 + $0x3c] sm:$0xf]
        %v820 = vld [vmem:[%s6] sm:$0x1]
        %v822 = vperm.slane %v820, 0
        %v840 = vunpack.c.l.b16 %v804
        %v841 = vunpack.c.l.b16 %v805
        %v842 = vunpack.c.l.b16 %v806
        %v843 = vunpack.c.l.b16 %v807
        %v844 = vunpack.c.l.b16 %v808
        %v845 = vunpack.c.l.b16 %v809
        %v846 = vunpack.c.l.b16 %v810
        %v847 = vunpack.c.l.b16 %v811
        %v848 = vunpack.c.l.b16 %v812
        %v849 = vunpack.c.l.b16 %v813
        %v850 = vunpack.c.l.b16 %v814
        %v851 = vunpack.c.l.b16 %v815
        %v852 = vunpack.c.l.b16 %v816
        %v853 = vunpack.c.l.b16 %v817
        %v854 = vunpack.c.l.b16 %v818
        %v855 = vunpack.c.l.b16 %v819
        %v856 = vpack.c.b16 %v841, %v840
        %v857 = vpack.c.b16 %v843, %v842
        %v858 = vpack.c.b16 %v845, %v844
        %v859 = vpack.c.b16 %v847, %v846
        %v860 = vpack.c.b16 %v849, %v848
        %v861 = vpack.c.b16 %v851, %v850
        %v862 = vpack.c.b16 %v853, %v852
        %v863 = vpack.c.b16 %v855, %v854
        %872 = vmatpush.bf16.msra.mxu0 %v863
        %873 = vmatpush.bf16.msra.mxu0 %v862
        %874 = vmatpush.bf16.msra.mxu0 %v861
        %875 = vmatpush.bf16.msra.mxu0 %v860
        %876 = vmatpush.bf16.msra.mxu0 %v859
        %877 = vmatpush.bf16.msra.mxu0 %v858
        %878 = vmatpush.bf16.msra.mxu0 %v857
        %879 = vmatpush.bf16.msra.mxu0 %v856
        %880 = vmatmul.bf16.gmra.mxu0 %v788
        %v881 = vpop.f32.mrf.mxu0
        %v882 = vadd.f32 %v822, %v881
        %v883 = vpop.f32.mrf.mxu0
        %v884 = vadd.f32 %v822, %v883
        %885 = vmatmul.bf16.gmra.mxu0 %v789
        %v886 = vpop.f32.mrf.mxu0
        %v887 = vadd.f32 %v822, %v886
        %v888 = vpop.f32.mrf.mxu0
        %v889 = vadd.f32 %v822, %v888
        %890 = vmatmul.bf16.gmra.mxu0 %v790
        %v891 = vpop.f32.mrf.mxu0
        %v892 = vadd.f32 %v822, %v891
        %v893 = vpop.f32.mrf.mxu0
        %v894 = vadd.f32 %v822, %v893
        %895 = vmatmul.bf16.gmra.mxu0 %v791
        %v896 = vpop.f32.mrf.mxu0
        %v897 = vadd.f32 %v822, %v896
        %v898 = vpop.f32.mrf.mxu0
        %v899 = vadd.f32 %v822, %v898
        %900 = vmatmul.bf16.gmra.mxu0 %v792
        %v901 = vpop.f32.mrf.mxu0
        %v902 = vadd.f32 %v822, %v901
        %v903 = vpop.f32.mrf.mxu0
        %v904 = vadd.f32 %v822, %v903
        %905 = vmatmul.bf16.gmra.mxu0 %v793
        %v906 = vpop.f32.mrf.mxu0
        %v907 = vadd.f32 %v822, %v906
        %v908 = vpop.f32.mrf.mxu0
        %v909 = vadd.f32 %v822, %v908
        %910 = vmatmul.bf16.gmra.mxu0 %v794
        %v911 = vpop.f32.mrf.mxu0
        %v912 = vadd.f32 %v822, %v911
        %v913 = vpop.f32.mrf.mxu0
        %v914 = vadd.f32 %v822, %v913
        %915 = vmatmul.bf16.gmra.mxu0 %v795
        %v916 = vpop.f32.mrf.mxu0
        %v917 = vadd.f32 %v822, %v916
        %v918 = vpop.f32.mrf.mxu0
        %v919 = vadd.f32 %v822, %v918
        %920 = vmatmul.bf16.gmra.mxu0 %v796
        %v921 = vpop.f32.mrf.mxu0
        %v922 = vadd.f32 %v822, %v921
        %v923 = vpop.f32.mrf.mxu0
        %v924 = vadd.f32 %v822, %v923
        %925 = vmatmul.bf16.gmra.mxu0 %v797
        %v926 = vpop.f32.mrf.mxu0
        %v927 = vadd.f32 %v822, %v926
        %v928 = vpop.f32.mrf.mxu0
        %v929 = vadd.f32 %v822, %v928
        %930 = vmatmul.bf16.gmra.mxu0 %v798
        %v931 = vpop.f32.mrf.mxu0
        %v932 = vadd.f32 %v822, %v931
        %v933 = vpop.f32.mrf.mxu0
        %v934 = vadd.f32 %v822, %v933
        %935 = vmatmul.bf16.gmra.mxu0 %v799
        %v936 = vpop.f32.mrf.mxu0
        %v937 = vadd.f32 %v822, %v936
        %v938 = vpop.f32.mrf.mxu0
        %v939 = vadd.f32 %v822, %v938
        %940 = vmatmul.bf16.gmra.mxu0 %v800
        %v941 = vpop.f32.mrf.mxu0
        %v942 = vadd.f32 %v822, %v941
        %v943 = vpop.f32.mrf.mxu0
        %v944 = vadd.f32 %v822, %v943
        %945 = vmatmul.bf16.gmra.mxu0 %v801
        %v946 = vpop.f32.mrf.mxu0
        %v947 = vadd.f32 %v822, %v946
        %v948 = vpop.f32.mrf.mxu0
        %v949 = vadd.f32 %v822, %v948
        %950 = vmatmul.bf16.gmra.mxu0 %v802
        %v951 = vpop.f32.mrf.mxu0
        %v952 = vadd.f32 %v822, %v951
        %v953 = vpop.f32.mrf.mxu0
        %v954 = vadd.f32 %v822, %v953
        %955 = vmatmul.bf16.gmra.mxu0 %v803
        %v956 = vpop.f32.mrf.mxu0
        %v957 = vadd.f32 %v822, %v956
        %v958 = vpop.f32.mrf.mxu0
        %v959 = vadd.f32 %v822, %v958
        %960 = vdwg.mxu0
        %v961 = vxor.u32 %v882, 2147483648
        %v962 = vxor.u32 %v884, 2147483648
        %v963 = vxor.u32 %v887, 2147483648
        %v964 = vxor.u32 %v889, 2147483648
        %v965 = vxor.u32 %v892, 2147483648
        %v966 = vxor.u32 %v894, 2147483648
        %v967 = vxor.u32 %v897, 2147483648
        %v968 = vxor.u32 %v899, 2147483648
        %v969 = vxor.u32 %v902, 2147483648
        %v970 = vxor.u32 %v904, 2147483648
        %v971 = vxor.u32 %v907, 2147483648
        %v972 = vxor.u32 %v909, 2147483648
        %v973 = vxor.u32 %v912, 2147483648
        %v974 = vxor.u32 %v914, 2147483648
        %v975 = vxor.u32 %v917, 2147483648
        %v976 = vxor.u32 %v919, 2147483648
        %v977 = vxor.u32 %v922, 2147483648
        %v978 = vxor.u32 %v924, 2147483648
        %v979 = vxor.u32 %v927, 2147483648
        %v980 = vxor.u32 %v929, 2147483648
        %v981 = vxor.u32 %v932, 2147483648
        %v982 = vxor.u32 %v934, 2147483648
        %v983 = vxor.u32 %v937, 2147483648
        %v984 = vxor.u32 %v939, 2147483648
        %v985 = vxor.u32 %v942, 2147483648
        %v986 = vxor.u32 %v944, 2147483648
        %v987 = vxor.u32 %v947, 2147483648
        %v988 = vxor.u32 %v949, 2147483648
        %v989 = vxor.u32 %v952, 2147483648
        %v990 = vxor.u32 %v954, 2147483648
        %v991 = vxor.u32 %v957, 2147483648
        %v992 = vxor.u32 %v959, 2147483648
        %v993 = vmul.f32 %v961, 1.442695
        %v994 = vpow.pop %v993
        %v995 = vmul.f32 %v962, 1.442695
        %v996 = vpow.pop %v995
        %v997 = vmul.f32 %v963, 1.442695
        %v998 = vpow.pop %v997
        %v999 = vmul.f32 %v964, 1.442695
        %v1000 = vpow.pop %v999
        %v1001 = vmul.f32 %v965, 1.442695
        %v1002 = vpow.pop %v1001
        %v1003 = vmul.f32 %v966, 1.442695
        %v1004 = vpow.pop %v1003
        %v1005 = vmul.f32 %v967, 1.442695
        %v1006 = vpow.pop %v1005
        %v1007 = vmul.f32 %v968, 1.442695
        %v1008 = vpow.pop %v1007
        %v1009 = vmul.f32 %v969, 1.442695
        %v1010 = vpow.pop %v1009
        %v1011 = vmul.f32 %v970, 1.442695
        %v1012 = vpow.pop %v1011
        %v1013 = vmul.f32 %v971, 1.442695
        %v1014 = vpow.pop %v1013
        %v1015 = vmul.f32 %v972, 1.442695
        %v1016 = vpow.pop %v1015
        %v1017 = vmul.f32 %v973, 1.442695
        %v1018 = vpow.pop %v1017
        %v1019 = vmul.f32 %v974, 1.442695
        %v1020 = vpow.pop %v1019
        %v1021 = vmul.f32 %v975, 1.442695
        %v1022 = vpow.pop %v1021
        %v1023 = vmul.f32 %v976, 1.442695
        %v1024 = vpow.pop %v1023
        %v1025 = vmul.f32 %v977, 1.442695
        %v1026 = vpow.pop %v1025
        %v1027 = vmul.f32 %v978, 1.442695
        %v1028 = vpow.pop %v1027
        %v1029 = vmul.f32 %v979, 1.442695
        %v1030 = vpow.pop %v1029
        %v1031 = vmul.f32 %v980, 1.442695
        %v1032 = vpow.pop %v1031
        %v1033 = vmul.f32 %v981, 1.442695
        %v1034 = vpow.pop %v1033
        %v1035 = vmul.f32 %v982, 1.442695
        %v1036 = vpow.pop %v1035
        %v1037 = vmul.f32 %v983, 1.442695
        %v1038 = vpow.pop %v1037
        %v1039 = vmul.f32 %v984, 1.442695
        %v1040 = vpow.pop %v1039
        %v1041 = vmul.f32 %v985, 1.442695
        %v1042 = vpow.pop %v1041
        %v1043 = vmul.f32 %v986, 1.442695
        %v1044 = vpow.pop %v1043
        %v1045 = vmul.f32 %v987, 1.442695
        %v1046 = vpow.pop %v1045
        %v1047 = vmul.f32 %v988, 1.442695
        %v1048 = vpow.pop %v1047
        %v1049 = vmul.f32 %v989, 1.442695
        %v1050 = vpow.pop %v1049
        %v1051 = vmul.f32 %v990, 1.442695
        %v1052 = vpow.pop %v1051
        %v1053 = vmul.f32 %v991, 1.442695
        %v1054 = vpow.pop %v1053
        %v1055 = vmul.f32 %v992, 1.442695
        %v1056 = vpow.pop %v1055
        %v1057 = vadd.f32 %v994, 1.0
        %v1058 = vadd.f32 %v996, 1.0
        %v1059 = vadd.f32 %v998, 1.0
        %v1060 = vadd.f32 %v1000, 1.0
        %v1061 = vadd.f32 %v1002, 1.0
        %v1062 = vadd.f32 %v1004, 1.0
        %v1063 = vadd.f32 %v1006, 1.0
        %v1064 = vadd.f32 %v1008, 1.0
        %v1065 = vadd.f32 %v1010, 1.0
        %v1066 = vadd.f32 %v1012, 1.0
        %v1067 = vadd.f32 %v1014, 1.0
        %v1068 = vadd.f32 %v1016, 1.0
        %v1069 = vadd.f32 %v1018, 1.0
        %v1070 = vadd.f32 %v1020, 1.0
        %v1071 = vadd.f32 %v1022, 1.0
        %v1072 = vadd.f32 %v1024, 1.0
        %v1073 = vadd.f32 %v1026, 1.0
        %v1074 = vadd.f32 %v1028, 1.0
        %v1075 = vadd.f32 %v1030, 1.0
        %v1076 = vadd.f32 %v1032, 1.0
        %v1077 = vadd.f32 %v1034, 1.0
        %v1078 = vadd.f32 %v1036, 1.0
        %v1079 = vadd.f32 %v1038, 1.0
        %v1080 = vadd.f32 %v1040, 1.0
        %v1081 = vadd.f32 %v1042, 1.0
        %v1082 = vadd.f32 %v1044, 1.0
        %v1083 = vadd.f32 %v1046, 1.0
        %v1084 = vadd.f32 %v1048, 1.0
        %v1085 = vadd.f32 %v1050, 1.0
        %v1086 = vadd.f32 %v1052, 1.0
        %v1087 = vadd.f32 %v1054, 1.0
        %v1088 = vadd.f32 %v1056, 1.0
        %v1089 = vrcp.pop %v1057
        %v1090 = vmul.f32 %v1057, %v1089
        %v1091 = vsub.f32 1.0, %v1090
        %v1092 = vmul.f32 %v1089, %v1091
        %v1093 = vadd.f32 %v1089, %v1092
        %vm1094 = vweird.f32 %v1057
        %vm1095 = vweird.f32 %v1089
        %vm1096 = vmor %vm1094, %vm1095
        %v1097 = vsel %vm1096, %v1089, %v1093
        %v1098 = vand.u32 2147483647, %v1057
        %vm1099 = vcmp.eq.f32.partialorder %v1098, 8.507059e+37
        %v1100 = vand.u32 %v1057, 2147483648
        %v1101 = vor.u32 1.1754944e-38, %v1100
        %v1102 = vsel %vm1099, %v1101, %v1097
        %v1103 = vmul.f32 1.0, %v1102
        %v1104 = vrcp.pop %v1058
        %v1105 = vmul.f32 %v1058, %v1104
        %v1106 = vsub.f32 1.0, %v1105
        %v1107 = vmul.f32 %v1104, %v1106
        %v1108 = vadd.f32 %v1104, %v1107
        %vm1109 = vweird.f32 %v1058
        %vm1110 = vweird.f32 %v1104
        %vm1111 = vmor %vm1109, %vm1110
        %v1112 = vsel %vm1111, %v1104, %v1108
        %v1113 = vand.u32 2147483647, %v1058
        %vm1114 = vcmp.eq.f32.partialorder %v1113, 8.507059e+37
        %v1115 = vand.u32 %v1058, 2147483648
        %v1116 = vor.u32 1.1754944e-38, %v1115
        %v1117 = vsel %vm1114, %v1116, %v1112
        %v1118 = vmul.f32 1.0, %v1117
        %v1119 = vrcp.pop %v1059
        %v1120 = vmul.f32 %v1059, %v1119
        %v1121 = vsub.f32 1.0, %v1120
        %v1122 = vmul.f32 %v1119, %v1121
        %v1123 = vadd.f32 %v1119, %v1122
        %vm1124 = vweird.f32 %v1059
        %vm1125 = vweird.f32 %v1119
        %vm1126 = vmor %vm1124, %vm1125
        %v1127 = vsel %vm1126, %v1119, %v1123
        %v1128 = vand.u32 2147483647, %v1059
        %vm1129 = vcmp.eq.f32.partialorder %v1128, 8.507059e+37
        %v1130 = vand.u32 %v1059, 2147483648
        %v1131 = vor.u32 1.1754944e-38, %v1130
        %v1132 = vsel %vm1129, %v1131, %v1127
        %v1133 = vmul.f32 1.0, %v1132
        %v1134 = vrcp.pop %v1060
        %v1135 = vmul.f32 %v1060, %v1134
        %v1136 = vsub.f32 1.0, %v1135
        %v1137 = vmul.f32 %v1134, %v1136
        %v1138 = vadd.f32 %v1134, %v1137
        %vm1139 = vweird.f32 %v1060
        %vm1140 = vweird.f32 %v1134
        %vm1141 = vmor %vm1139, %vm1140
        %v1142 = vsel %vm1141, %v1134, %v1138
        %v1143 = vand.u32 2147483647, %v1060
        %vm1144 = vcmp.eq.f32.partialorder %v1143, 8.507059e+37
        %v1145 = vand.u32 %v1060, 2147483648
        %v1146 = vor.u32 1.1754944e-38, %v1145
        %v1147 = vsel %vm1144, %v1146, %v1142
        %v1148 = vmul.f32 1.0, %v1147
        %v1149 = vrcp.pop %v1061
        %v1150 = vmul.f32 %v1061, %v1149
        %v1151 = vsub.f32 1.0, %v1150
        %v1152 = vmul.f32 %v1149, %v1151
        %v1153 = vadd.f32 %v1149, %v1152
        %vm1154 = vweird.f32 %v1061
        %vm1155 = vweird.f32 %v1149
        %vm1156 = vmor %vm1154, %vm1155
        %v1157 = vsel %vm1156, %v1149, %v1153
        %v1158 = vand.u32 2147483647, %v1061
        %vm1159 = vcmp.eq.f32.partialorder %v1158, 8.507059e+37
        %v1160 = vand.u32 %v1061, 2147483648
        %v1161 = vor.u32 1.1754944e-38, %v1160
        %v1162 = vsel %vm1159, %v1161, %v1157
        %v1163 = vmul.f32 1.0, %v1162
        %v1164 = vrcp.pop %v1062
        %v1165 = vmul.f32 %v1062, %v1164
        %v1166 = vsub.f32 1.0, %v1165
        %v1167 = vmul.f32 %v1164, %v1166
        %v1168 = vadd.f32 %v1164, %v1167
        %vm1169 = vweird.f32 %v1062
        %vm1170 = vweird.f32 %v1164
        %vm1171 = vmor %vm1169, %vm1170
        %v1172 = vsel %vm1171, %v1164, %v1168
        %v1173 = vand.u32 2147483647, %v1062
        %vm1174 = vcmp.eq.f32.partialorder %v1173, 8.507059e+37
        %v1175 = vand.u32 %v1062, 2147483648
        %v1176 = vor.u32 1.1754944e-38, %v1175
        %v1177 = vsel %vm1174, %v1176, %v1172
        %v1178 = vmul.f32 1.0, %v1177
        %v1179 = vrcp.pop %v1063
        %v1180 = vmul.f32 %v1063, %v1179
        %v1181 = vsub.f32 1.0, %v1180
        %v1182 = vmul.f32 %v1179, %v1181
        %v1183 = vadd.f32 %v1179, %v1182
        %vm1184 = vweird.f32 %v1063
        %vm1185 = vweird.f32 %v1179
        %vm1186 = vmor %vm1184, %vm1185
        %v1187 = vsel %vm1186, %v1179, %v1183
        %v1188 = vand.u32 2147483647, %v1063
        %vm1189 = vcmp.eq.f32.partialorder %v1188, 8.507059e+37
        %v1190 = vand.u32 %v1063, 2147483648
        %v1191 = vor.u32 1.1754944e-38, %v1190
        %v1192 = vsel %vm1189, %v1191, %v1187
        %v1193 = vmul.f32 1.0, %v1192
        %v1194 = vrcp.pop %v1064
        %v1195 = vmul.f32 %v1064, %v1194
        %v1196 = vsub.f32 1.0, %v1195
        %v1197 = vmul.f32 %v1194, %v1196
        %v1198 = vadd.f32 %v1194, %v1197
        %vm1199 = vweird.f32 %v1064
        %vm1200 = vweird.f32 %v1194
        %vm1201 = vmor %vm1199, %vm1200
        %v1202 = vsel %vm1201, %v1194, %v1198
        %v1203 = vand.u32 2147483647, %v1064
        %vm1204 = vcmp.eq.f32.partialorder %v1203, 8.507059e+37
        %v1205 = vand.u32 %v1064, 2147483648
        %v1206 = vor.u32 1.1754944e-38, %v1205
        %v1207 = vsel %vm1204, %v1206, %v1202
        %v1208 = vmul.f32 1.0, %v1207
        %v1209 = vrcp.pop %v1065
        %v1210 = vmul.f32 %v1065, %v1209
        %v1211 = vsub.f32 1.0, %v1210
        %v1212 = vmul.f32 %v1209, %v1211
        %v1213 = vadd.f32 %v1209, %v1212
        %vm1214 = vweird.f32 %v1065
        %vm1215 = vweird.f32 %v1209
        %vm1216 = vmor %vm1214, %vm1215
        %v1217 = vsel %vm1216, %v1209, %v1213
        %v1218 = vand.u32 2147483647, %v1065
        %vm1219 = vcmp.eq.f32.partialorder %v1218, 8.507059e+37
        %v1220 = vand.u32 %v1065, 2147483648
        %v1221 = vor.u32 1.1754944e-38, %v1220
        %v1222 = vsel %vm1219, %v1221, %v1217
        %v1223 = vmul.f32 1.0, %v1222
        %v1224 = vrcp.pop %v1066
        %v1225 = vmul.f32 %v1066, %v1224
        %v1226 = vsub.f32 1.0, %v1225
        %v1227 = vmul.f32 %v1224, %v1226
        %v1228 = vadd.f32 %v1224, %v1227
        %vm1229 = vweird.f32 %v1066
        %vm1230 = vweird.f32 %v1224
        %vm1231 = vmor %vm1229, %vm1230
        %v1232 = vsel %vm1231, %v1224, %v1228
        %v1233 = vand.u32 2147483647, %v1066
        %vm1234 = vcmp.eq.f32.partialorder %v1233, 8.507059e+37
        %v1235 = vand.u32 %v1066, 2147483648
        %v1236 = vor.u32 1.1754944e-38, %v1235
        %v1237 = vsel %vm1234, %v1236, %v1232
        %v1238 = vmul.f32 1.0, %v1237
        %v1239 = vrcp.pop %v1067
        %v1240 = vmul.f32 %v1067, %v1239
        %v1241 = vsub.f32 1.0, %v1240
        %v1242 = vmul.f32 %v1239, %v1241
        %v1243 = vadd.f32 %v1239, %v1242
        %vm1244 = vweird.f32 %v1067
        %vm1245 = vweird.f32 %v1239
        %vm1246 = vmor %vm1244, %vm1245
        %v1247 = vsel %vm1246, %v1239, %v1243
        %v1248 = vand.u32 2147483647, %v1067
        %vm1249 = vcmp.eq.f32.partialorder %v1248, 8.507059e+37
        %v1250 = vand.u32 %v1067, 2147483648
        %v1251 = vor.u32 1.1754944e-38, %v1250
        %v1252 = vsel %vm1249, %v1251, %v1247
        %v1253 = vmul.f32 1.0, %v1252
        %v1254 = vrcp.pop %v1068
        %v1255 = vmul.f32 %v1068, %v1254
        %v1256 = vsub.f32 1.0, %v1255
        %v1257 = vmul.f32 %v1254, %v1256
        %v1258 = vadd.f32 %v1254, %v1257
        %vm1259 = vweird.f32 %v1068
        %vm1260 = vweird.f32 %v1254
        %vm1261 = vmor %vm1259, %vm1260
        %v1262 = vsel %vm1261, %v1254, %v1258
        %v1263 = vand.u32 2147483647, %v1068
        %vm1264 = vcmp.eq.f32.partialorder %v1263, 8.507059e+37
        %v1265 = vand.u32 %v1068, 2147483648
        %v1266 = vor.u32 1.1754944e-38, %v1265
        %v1267 = vsel %vm1264, %v1266, %v1262
        %v1268 = vmul.f32 1.0, %v1267
        %v1269 = vrcp.pop %v1069
        %v1270 = vmul.f32 %v1069, %v1269
        %v1271 = vsub.f32 1.0, %v1270
        %v1272 = vmul.f32 %v1269, %v1271
        %v1273 = vadd.f32 %v1269, %v1272
        %vm1274 = vweird.f32 %v1069
        %vm1275 = vweird.f32 %v1269
        %vm1276 = vmor %vm1274, %vm1275
        %v1277 = vsel %vm1276, %v1269, %v1273
        %v1278 = vand.u32 2147483647, %v1069
        %vm1279 = vcmp.eq.f32.partialorder %v1278, 8.507059e+37
        %v1280 = vand.u32 %v1069, 2147483648
        %v1281 = vor.u32 1.1754944e-38, %v1280
        %v1282 = vsel %vm1279, %v1281, %v1277
        %v1283 = vmul.f32 1.0, %v1282
        %v1284 = vrcp.pop %v1070
        %v1285 = vmul.f32 %v1070, %v1284
        %v1286 = vsub.f32 1.0, %v1285
        %v1287 = vmul.f32 %v1284, %v1286
        %v1288 = vadd.f32 %v1284, %v1287
        %vm1289 = vweird.f32 %v1070
        %vm1290 = vweird.f32 %v1284
        %vm1291 = vmor %vm1289, %vm1290
        %v1292 = vsel %vm1291, %v1284, %v1288
        %v1293 = vand.u32 2147483647, %v1070
        %vm1294 = vcmp.eq.f32.partialorder %v1293, 8.507059e+37
        %v1295 = vand.u32 %v1070, 2147483648
        %v1296 = vor.u32 1.1754944e-38, %v1295
        %v1297 = vsel %vm1294, %v1296, %v1292
        %v1298 = vmul.f32 1.0, %v1297
        %v1299 = vrcp.pop %v1071
        %v1300 = vmul.f32 %v1071, %v1299
        %v1301 = vsub.f32 1.0, %v1300
        %v1302 = vmul.f32 %v1299, %v1301
        %v1303 = vadd.f32 %v1299, %v1302
        %vm1304 = vweird.f32 %v1071
        %vm1305 = vweird.f32 %v1299
        %vm1306 = vmor %vm1304, %vm1305
        %v1307 = vsel %vm1306, %v1299, %v1303
        %v1308 = vand.u32 2147483647, %v1071
        %vm1309 = vcmp.eq.f32.partialorder %v1308, 8.507059e+37
        %v1310 = vand.u32 %v1071, 2147483648
        %v1311 = vor.u32 1.1754944e-38, %v1310
        %v1312 = vsel %vm1309, %v1311, %v1307
        %v1313 = vmul.f32 1.0, %v1312
        %v1314 = vrcp.pop %v1072
        %v1315 = vmul.f32 %v1072, %v1314
        %v1316 = vsub.f32 1.0, %v1315
        %v1317 = vmul.f32 %v1314, %v1316
        %v1318 = vadd.f32 %v1314, %v1317
        %vm1319 = vweird.f32 %v1072
        %vm1320 = vweird.f32 %v1314
        %vm1321 = vmor %vm1319, %vm1320
        %v1322 = vsel %vm1321, %v1314, %v1318
        %v1323 = vand.u32 2147483647, %v1072
        %vm1324 = vcmp.eq.f32.partialorder %v1323, 8.507059e+37
        %v1325 = vand.u32 %v1072, 2147483648
        %v1326 = vor.u32 1.1754944e-38, %v1325
        %v1327 = vsel %vm1324, %v1326, %v1322
        %v1328 = vmul.f32 1.0, %v1327
        %v1329 = vrcp.pop %v1073
        %v1330 = vmul.f32 %v1073, %v1329
        %v1331 = vsub.f32 1.0, %v1330
        %v1332 = vmul.f32 %v1329, %v1331
        %v1333 = vadd.f32 %v1329, %v1332
        %vm1334 = vweird.f32 %v1073
        %vm1335 = vweird.f32 %v1329
        %vm1336 = vmor %vm1334, %vm1335
        %v1337 = vsel %vm1336, %v1329, %v1333
        %v1338 = vand.u32 2147483647, %v1073
        %vm1339 = vcmp.eq.f32.partialorder %v1338, 8.507059e+37
        %v1340 = vand.u32 %v1073, 2147483648
        %v1341 = vor.u32 1.1754944e-38, %v1340
        %v1342 = vsel %vm1339, %v1341, %v1337
        %v1343 = vmul.f32 1.0, %v1342
        %v1344 = vrcp.pop %v1074
        %v1345 = vmul.f32 %v1074, %v1344
        %v1346 = vsub.f32 1.0, %v1345
        %v1347 = vmul.f32 %v1344, %v1346
        %v1348 = vadd.f32 %v1344, %v1347
        %vm1349 = vweird.f32 %v1074
        %vm1350 = vweird.f32 %v1344
        %vm1351 = vmor %vm1349, %vm1350
        %v1352 = vsel %vm1351, %v1344, %v1348
        %v1353 = vand.u32 2147483647, %v1074
        %vm1354 = vcmp.eq.f32.partialorder %v1353, 8.507059e+37
        %v1355 = vand.u32 %v1074, 2147483648
        %v1356 = vor.u32 1.1754944e-38, %v1355
        %v1357 = vsel %vm1354, %v1356, %v1352
        %v1358 = vmul.f32 1.0, %v1357
        %v1359 = vrcp.pop %v1075
        %v1360 = vmul.f32 %v1075, %v1359
        %v1361 = vsub.f32 1.0, %v1360
        %v1362 = vmul.f32 %v1359, %v1361
        %v1363 = vadd.f32 %v1359, %v1362
        %vm1364 = vweird.f32 %v1075
        %vm1365 = vweird.f32 %v1359
        %vm1366 = vmor %vm1364, %vm1365
        %v1367 = vsel %vm1366, %v1359, %v1363
        %v1368 = vand.u32 2147483647, %v1075
        %vm1369 = vcmp.eq.f32.partialorder %v1368, 8.507059e+37
        %v1370 = vand.u32 %v1075, 2147483648
        %v1371 = vor.u32 1.1754944e-38, %v1370
        %v1372 = vsel %vm1369, %v1371, %v1367
        %v1373 = vmul.f32 1.0, %v1372
        %v1374 = vrcp.pop %v1076
        %v1375 = vmul.f32 %v1076, %v1374
        %v1376 = vsub.f32 1.0, %v1375
        %v1377 = vmul.f32 %v1374, %v1376
        %v1378 = vadd.f32 %v1374, %v1377
        %vm1379 = vweird.f32 %v1076
        %vm1380 = vweird.f32 %v1374
        %vm1381 = vmor %vm1379, %vm1380
        %v1382 = vsel %vm1381, %v1374, %v1378
        %v1383 = vand.u32 2147483647, %v1076
        %vm1384 = vcmp.eq.f32.partialorder %v1383, 8.507059e+37
        %v1385 = vand.u32 %v1076, 2147483648
        %v1386 = vor.u32 1.1754944e-38, %v1385
        %v1387 = vsel %vm1384, %v1386, %v1382
        %v1388 = vmul.f32 1.0, %v1387
        %v1389 = vrcp.pop %v1077
        %v1390 = vmul.f32 %v1077, %v1389
        %v1391 = vsub.f32 1.0, %v1390
        %v1392 = vmul.f32 %v1389, %v1391
        %v1393 = vadd.f32 %v1389, %v1392
        %vm1394 = vweird.f32 %v1077
        %vm1395 = vweird.f32 %v1389
        %vm1396 = vmor %vm1394, %vm1395
        %v1397 = vsel %vm1396, %v1389, %v1393
        %v1398 = vand.u32 2147483647, %v1077
        %vm1399 = vcmp.eq.f32.partialorder %v1398, 8.507059e+37
        %v1400 = vand.u32 %v1077, 2147483648
        %v1401 = vor.u32 1.1754944e-38, %v1400
        %v1402 = vsel %vm1399, %v1401, %v1397
        %v1403 = vmul.f32 1.0, %v1402
        %v1404 = vrcp.pop %v1078
        %v1405 = vmul.f32 %v1078, %v1404
        %v1406 = vsub.f32 1.0, %v1405
        %v1407 = vmul.f32 %v1404, %v1406
        %v1408 = vadd.f32 %v1404, %v1407
        %vm1409 = vweird.f32 %v1078
        %vm1410 = vweird.f32 %v1404
        %vm1411 = vmor %vm1409, %vm1410
        %v1412 = vsel %vm1411, %v1404, %v1408
        %v1413 = vand.u32 2147483647, %v1078
        %vm1414 = vcmp.eq.f32.partialorder %v1413, 8.507059e+37
        %v1415 = vand.u32 %v1078, 2147483648
        %v1416 = vor.u32 1.1754944e-38, %v1415
        %v1417 = vsel %vm1414, %v1416, %v1412
        %v1418 = vmul.f32 1.0, %v1417
        %v1419 = vrcp.pop %v1079
        %v1420 = vmul.f32 %v1079, %v1419
        %v1421 = vsub.f32 1.0, %v1420
        %v1422 = vmul.f32 %v1419, %v1421
        %v1423 = vadd.f32 %v1419, %v1422
        %vm1424 = vweird.f32 %v1079
        %vm1425 = vweird.f32 %v1419
        %vm1426 = vmor %vm1424, %vm1425
        %v1427 = vsel %vm1426, %v1419, %v1423
        %v1428 = vand.u32 2147483647, %v1079
        %vm1429 = vcmp.eq.f32.partialorder %v1428, 8.507059e+37
        %v1430 = vand.u32 %v1079, 2147483648
        %v1431 = vor.u32 1.1754944e-38, %v1430
        %v1432 = vsel %vm1429, %v1431, %v1427
        %v1433 = vmul.f32 1.0, %v1432
        %v1434 = vrcp.pop %v1080
        %v1435 = vmul.f32 %v1080, %v1434
        %v1436 = vsub.f32 1.0, %v1435
        %v1437 = vmul.f32 %v1434, %v1436
        %v1438 = vadd.f32 %v1434, %v1437
        %vm1439 = vweird.f32 %v1080
        %vm1440 = vweird.f32 %v1434
        %vm1441 = vmor %vm1439, %vm1440
        %v1442 = vsel %vm1441, %v1434, %v1438
        %v1443 = vand.u32 2147483647, %v1080
        %vm1444 = vcmp.eq.f32.partialorder %v1443, 8.507059e+37
        %v1445 = vand.u32 %v1080, 2147483648
        %v1446 = vor.u32 1.1754944e-38, %v1445
        %v1447 = vsel %vm1444, %v1446, %v1442
        %v1448 = vmul.f32 1.0, %v1447
        %v1449 = vrcp.pop %v1081
        %v1450 = vmul.f32 %v1081, %v1449
        %v1451 = vsub.f32 1.0, %v1450
        %v1452 = vmul.f32 %v1449, %v1451
        %v1453 = vadd.f32 %v1449, %v1452
        %vm1454 = vweird.f32 %v1081
        %vm1455 = vweird.f32 %v1449
        %vm1456 = vmor %vm1454, %vm1455
        %v1457 = vsel %vm1456, %v1449, %v1453
        %v1458 = vand.u32 2147483647, %v1081
        %vm1459 = vcmp.eq.f32.partialorder %v1458, 8.507059e+37
        %v1460 = vand.u32 %v1081, 2147483648
        %v1461 = vor.u32 1.1754944e-38, %v1460
        %v1462 = vsel %vm1459, %v1461, %v1457
        %v1463 = vmul.f32 1.0, %v1462
        %v1464 = vrcp.pop %v1082
        %v1465 = vmul.f32 %v1082, %v1464
        %v1466 = vsub.f32 1.0, %v1465
        %v1467 = vmul.f32 %v1464, %v1466
        %v1468 = vadd.f32 %v1464, %v1467
        %vm1469 = vweird.f32 %v1082
        %vm1470 = vweird.f32 %v1464
        %vm1471 = vmor %vm1469, %vm1470
        %v1472 = vsel %vm1471, %v1464, %v1468
        %v1473 = vand.u32 2147483647, %v1082
        %vm1474 = vcmp.eq.f32.partialorder %v1473, 8.507059e+37
        %v1475 = vand.u32 %v1082, 2147483648
        %v1476 = vor.u32 1.1754944e-38, %v1475
        %v1477 = vsel %vm1474, %v1476, %v1472
        %v1478 = vmul.f32 1.0, %v1477
        %v1479 = vrcp.pop %v1083
        %v1480 = vmul.f32 %v1083, %v1479
        %v1481 = vsub.f32 1.0, %v1480
        %v1482 = vmul.f32 %v1479, %v1481
        %v1483 = vadd.f32 %v1479, %v1482
        %vm1484 = vweird.f32 %v1083
        %vm1485 = vweird.f32 %v1479
        %vm1486 = vmor %vm1484, %vm1485
        %v1487 = vsel %vm1486, %v1479, %v1483
        %v1488 = vand.u32 2147483647, %v1083
        %vm1489 = vcmp.eq.f32.partialorder %v1488, 8.507059e+37
        %v1490 = vand.u32 %v1083, 2147483648
        %v1491 = vor.u32 1.1754944e-38, %v1490
        %v1492 = vsel %vm1489, %v1491, %v1487
        %v1493 = vmul.f32 1.0, %v1492
        %v1494 = vrcp.pop %v1084
        %v1495 = vmul.f32 %v1084, %v1494
        %v1496 = vsub.f32 1.0, %v1495
        %v1497 = vmul.f32 %v1494, %v1496
        %v1498 = vadd.f32 %v1494, %v1497
        %vm1499 = vweird.f32 %v1084
        %vm1500 = vweird.f32 %v1494
        %vm1501 = vmor %vm1499, %vm1500
        %v1502 = vsel %vm1501, %v1494, %v1498
        %v1503 = vand.u32 2147483647, %v1084
        %vm1504 = vcmp.eq.f32.partialorder %v1503, 8.507059e+37
        %v1505 = vand.u32 %v1084, 2147483648
        %v1506 = vor.u32 1.1754944e-38, %v1505
        %v1507 = vsel %vm1504, %v1506, %v1502
        %v1508 = vmul.f32 1.0, %v1507
        %v1509 = vrcp.pop %v1085
        %v1510 = vmul.f32 %v1085, %v1509
        %v1511 = vsub.f32 1.0, %v1510
        %v1512 = vmul.f32 %v1509, %v1511
        %v1513 = vadd.f32 %v1509, %v1512
        %vm1514 = vweird.f32 %v1085
        %vm1515 = vweird.f32 %v1509
        %vm1516 = vmor %vm1514, %vm1515
        %v1517 = vsel %vm1516, %v1509, %v1513
        %v1518 = vand.u32 2147483647, %v1085
        %vm1519 = vcmp.eq.f32.partialorder %v1518, 8.507059e+37
        %v1520 = vand.u32 %v1085, 2147483648
        %v1521 = vor.u32 1.1754944e-38, %v1520
        %v1522 = vsel %vm1519, %v1521, %v1517
        %v1523 = vmul.f32 1.0, %v1522
        %v1524 = vrcp.pop %v1086
        %v1525 = vmul.f32 %v1086, %v1524
        %v1526 = vsub.f32 1.0, %v1525
        %v1527 = vmul.f32 %v1524, %v1526
        %v1528 = vadd.f32 %v1524, %v1527
        %vm1529 = vweird.f32 %v1086
        %vm1530 = vweird.f32 %v1524
        %vm1531 = vmor %vm1529, %vm1530
        %v1532 = vsel %vm1531, %v1524, %v1528
        %v1533 = vand.u32 2147483647, %v1086
        %vm1534 = vcmp.eq.f32.partialorder %v1533, 8.507059e+37
        %v1535 = vand.u32 %v1086, 2147483648
        %v1536 = vor.u32 1.1754944e-38, %v1535
        %v1537 = vsel %vm1534, %v1536, %v1532
        %v1538 = vmul.f32 1.0, %v1537
        %v1539 = vrcp.pop %v1087
        %v1540 = vmul.f32 %v1087, %v1539
        %v1541 = vsub.f32 1.0, %v1540
        %v1542 = vmul.f32 %v1539, %v1541
        %v1543 = vadd.f32 %v1539, %v1542
        %vm1544 = vweird.f32 %v1087
        %vm1545 = vweird.f32 %v1539
        %vm1546 = vmor %vm1544, %vm1545
        %v1547 = vsel %vm1546, %v1539, %v1543
        %v1548 = vand.u32 2147483647, %v1087
        %vm1549 = vcmp.eq.f32.partialorder %v1548, 8.507059e+37
        %v1550 = vand.u32 %v1087, 2147483648
        %v1551 = vor.u32 1.1754944e-38, %v1550
        %v1552 = vsel %vm1549, %v1551, %v1547
        %v1553 = vmul.f32 1.0, %v1552
        %v1554 = vrcp.pop %v1088
        %v1555 = vmul.f32 %v1088, %v1554
        %v1556 = vsub.f32 1.0, %v1555
        %v1557 = vmul.f32 %v1554, %v1556
        %v1558 = vadd.f32 %v1554, %v1557
        %vm1559 = vweird.f32 %v1088
        %vm1560 = vweird.f32 %v1554
        %vm1561 = vmor %vm1559, %vm1560
        %v1562 = vsel %vm1561, %v1554, %v1558
        %v1563 = vand.u32 2147483647, %v1088
        %vm1564 = vcmp.eq.f32.partialorder %v1563, 8.507059e+37
        %v1565 = vand.u32 %v1088, 2147483648
        %v1566 = vor.u32 1.1754944e-38, %v1565
        %v1567 = vsel %vm1564, %v1566, %v1562
        %v1568 = vmul.f32 1.0, %v1567
        %1569 = vst [vmem:[%s272] sm:$0xff] %v1103
        %1570 = vst [vmem:[%s272 + $0x8] sm:$0xff] %v1118
        %1571 = vst [vmem:[%s272 + $0x10] sm:$0xff] %v1133
        %1572 = vst [vmem:[%s272 + $0x18] sm:$0xff] %v1148
        %1573 = vst [vmem:[%s272 + $0x20] sm:$0xff] %v1163
        %1574 = vst [vmem:[%s272 + $0x28] sm:$0xff] %v1178
        %1575 = vst [vmem:[%s272 + $0x30] sm:$0xff] %v1193
        %1576 = vst [vmem:[%s272 + $0x38] sm:$0xff] %v1208
        %1577 = vst [vmem:[%s272 + $0x40] sm:$0xff] %v1223
        %1578 = vst [vmem:[%s272 + $0x48] sm:$0xff] %v1238
        %1579 = vst [vmem:[%s272 + $0x50] sm:$0xff] %v1253
        %1580 = vst [vmem:[%s272 + $0x58] sm:$0xff] %v1268
        %1581 = vst [vmem:[%s272 + $0x60] sm:$0xff] %v1283
        %1582 = vst [vmem:[%s272 + $0x68] sm:$0xff] %v1298
        %1583 = vst [vmem:[%s272 + $0x70] sm:$0xff] %v1313
        %1584 = vst [vmem:[%s272 + $0x78] sm:$0xff] %v1328
        %1585 = vst [vmem:[%s272 + $0x80] sm:$0xff] %v1343
        %1586 = vst [vmem:[%s272 + $0x88] sm:$0xff] %v1358
        %1587 = vst [vmem:[%s272 + $0x90] sm:$0xff] %v1373
        %1588 = vst [vmem:[%s272 + $0x98] sm:$0xff] %v1388
        %1589 = vst [vmem:[%s272 + $0xa0] sm:$0xff] %v1403
        %1590 = vst [vmem:[%s272 + $0xa8] sm:$0xff] %v1418
        %1591 = vst [vmem:[%s272 + $0xb0] sm:$0xff] %v1433
        %1592 = vst [vmem:[%s272 + $0xb8] sm:$0xff] %v1448
        %1593 = vst [vmem:[%s272 + $0xc0] sm:$0xff] %v1463
        %1594 = vst [vmem:[%s272 + $0xc8] sm:$0xff] %v1478
        %1595 = vst [vmem:[%s272 + $0xd0] sm:$0xff] %v1493
        %1596 = vst [vmem:[%s272 + $0xd8] sm:$0xff] %v1508
        %1597 = vst [vmem:[%s272 + $0xe0] sm:$0xff] %v1523
        %1598 = vst [vmem:[%s272 + $0xe8] sm:$0xff] %v1538
        %1599 = vst [vmem:[%s272 + $0xf0] sm:$0xff] %v1553
        %1600 = vst [vmem:[%s272 + $0xf8] sm:$0xff] %v1568
        %s1601 = sand.u32 %s181, 1
        %s1602 = scalar_lea.sflag [#allocation3], %s1601
        %s1603 = sand.u32 %s181, 1
        %s1604 = smul.addr %s1603, 256
        %s1605 = scalar_lea.vmem [#allocation2], %s1604
        // Predicated region
        $region49: #{tpu_custom_call.1} parent=47 // pred_check
          %p1606 = pneg %p191
        $region50: #{tpu_custom_call.1} parent=47 // pred_check_branch
          %1608 = sbr.rel (%p1606) target = $region52
        $region51: #{tpu_custom_call.1} parent=47 // pred_region
          %s1609 = smul.u32 32, %s21
          %1611 = vsyncadd %s1602, 0
          %s1612 = smul.addr %s1609, 8
          %s1613 = scalar_lea.hbm %s7, %s1612
          %s1614 = sshll.u32 %s1605, 4
          %s1615 = int_to_ptr.vmem [resolvable:$true] %s1614
          %s1616 = sshll.u32 %s1613, 4
          %s1617 = int_to_ptr.hbm [resolvable:$true] %s1616
          %1622 = dma.vmem_to_hbm [thread:$0]  %s1615, 4096, %s1617, %s1602, 128, 128, 8
        $region52: #{tpu_custom_call.1} parent=47 // pred_fallthru
          _
      $region48: #{tpu_custom_call.1} parent=5 // pred_fallthru
        _
      %p1623 = scmp.le.s32.totalorder 2, %s16
      // Predicated region
      $region53: #{tpu_custom_call.1} parent=5 // pred_check
        %p1624 = pneg %p1623
      $region54: #{tpu_custom_call.1} parent=5 // pred_check_branch
        %1626 = sbr.rel (%p1624) target = $region56
      $region55: #{tpu_custom_call.1} parent=5 // pred_region
        %s1627 = ssub.s32 %s16, 2
        // Predicated region
        $region57: #{tpu_custom_call.1} parent=55 // pred_check
          %p1628 = pneg %p197
        $region58: #{tpu_custom_call.1} parent=55 // pred_check_branch
          %1630 = sbr.rel (%p1628) target = $region60
        $region59: #{tpu_custom_call.1} parent=55 // pred_region
          %s1631 = sand.u32 %s182, 1
          %s1632 = scalar_lea.sflag [#allocation3], %s1631
          %s1633 = sand.u32 %s182, 1
          %s1634 = smul.addr %s1633, 256
          %s1635 = scalar_lea.vmem [#allocation2], %s1634
          %1637 = dma.done %s1632, 4096
        $region60: #{tpu_custom_call.1} parent=55 // pred_fallthru
          _
      $region56: #{tpu_custom_call.1} parent=5 // pred_fallthru
        _
    $region6: #{tpu_custom_call.1} parent=1 // loop_footer
      %s20 = sadd.s32 1, %s16
    $region7: #{tpu_custom_call.1} parent=1 // loop_footer_branch
      %15 = sbr.rel target = $region3
    $region8: #{tpu_custom_call.1} parent=1 // loop_exit
      _
    %1638 = vsyncpa [#allocation3], 1
    %s1639 = scalar_lea.sflag [#allocation3], 1
    %1640 = vsyncpa %s1639, 1

</llo_original>
